<compile_context>
chip_gen: v6e
topology: v6e:2x2x1
jax: 0.10.0
libtpu: 0.0.40
codegen_flags: <defaults>
</compile_context>

<pallas_src>
import functools
import math

import numpy as np
import jax
import jax.numpy as jnp
from jax import lax
from jax.experimental import pallas as pl
from jax.experimental.pallas import tpu as pltpu


# --------------------------------------------------------------------------
# helpers
# --------------------------------------------------------------------------
def _round_up(x: int, m: int) -> int:
    return ((x + m - 1) // m) * m


def _sublane_pack(itemsize: int) -> int:
    # rows per packed sublane tile: 8 (f32) / 16 (bf16) / 32 (int8)
    return 8 * max(1, 4 // max(1, itemsize))


def _vmem_limit_bytes() -> int:
    cap = 64 * 1024 * 1024                      # conservative default (v7x)
    try:
        info = pltpu.get_tpu_info()
        c = getattr(info, "vmem_capacity_bytes", None)
        if c:
            cap = int(c)
    except Exception:
        pass
    # leave ~25% headroom for the compiler, never request more than 96 MiB
    return min((cap // 4) * 3, 96 * 1024 * 1024)


def _pick_bands(h_in: int, h_outs, nc_tiles: int, target_steps: int = 8) -> int:
    """Band count for the 2nd grid axis.

    Constraints: d | H_in, d | every H_out (equal static block shapes and
    band-invariant relative source rows) and (H_in/d) % 8 == 0 (input band
    block keeps legal sublane tiling).
    """
    cands = [1]
    for d in range(2, h_in + 1):
        if h_in % d:
            continue
        if (h_in // d) % 8:
            continue
        if any(h % d for h in h_outs):
            continue
        cands.append(d)
    for d in sorted(cands):
        if nc_tiles * d >= target_steps:
            return d
    return max(cands)


def _pick_group(rows_band: int, w_out: int, w_in: int, itemsize: int,
                budget: int = 3 * 1024 * 1024) -> int:
    """Output rows folded into one block-diagonal selection matmul."""
    def nbytes(g):
        return (g * w_in) * (g * w_out) * itemsize

    g_align = 128 // math.gcd(w_out, 128)       # smallest g with g*w_out % 128 == 0
    if (g_align <= rows_band and rows_band % g_align == 0
            and nbytes(g_align) <= budget):
        return g_align
    best = 1
    for d in range(1, rows_band + 1):
        if rows_band % d == 0 and nbytes(d) <= budget:
            best = d
    return best


def _col_select(w_out: int, w_in: int) -> np.ndarray:
    """(W_in, W_out) one-hot matrix: PyTorch nearest column pick."""
    wi = (np.arange(w_out) * w_in) // w_out
    return (np.arange(w_in)[:, None] == wi[None, :]).astype(np.float32)


def _block_diag_select(w_out: int, w_in: int, g: int) -> np.ndarray:
    """(g*W_in, g*W_out) block-diagonal selection (g output rows per dot)."""
    base = _col_select(w_out, w_in)
    if g == 1:
        return base
    m = np.zeros((g * w_in, g * w_out), np.float32)
    for b in range(g):
        m[b * w_in:(b + 1) * w_in, b * w_out:(b + 1) * w_out] = base
    return m


# --------------------------------------------------------------------------
# fused multi-level kernel
# --------------------------------------------------------------------------
def _make_fused_kernel(levels, compute_dtype):
    """Refs: (x, sel_0..sel_{L-1}, out_0..out_{L-1}).

      x:     (TILE_NC, H_band, W_in)              current band of target planes
      sel_l: block-diag (g*W_in, g*W_out)  [banded]   or (W_in, W_out) [resident]
      out_l: (TILE_NC, rows_band*W_out)    [banded]   lane-dense band slab
             (TILE_NC, H_out, W_out)       [resident] full VMEM-resident slab
    """
    n_levels = len(levels)

    def kernel(x_ref, *refs):
        sel_refs = refs[:n_levels]
        out_refs = refs[n_levels:]
        r = pl.program_id(1)                           # band index
        for lvl, m in enumerate(levels):
            sel = sel_refs[lvl][...]
            o_ref = out_refs[lvl]
            w_out = m["w_out"]
            rows_band = m["rows_band"]
            rel_rows = m["rel_rows"]                   # band-invariant source rows
            if m["banded"]:
                g = m["g"]
                width = g * w_out                      # multiple of 128 on the fast path
                for jg in range(rows_band // g):       # small, bounded unroll
                    rows = rel_rows[jg * g:(jg + 1) * g]
                    if g == 1:
                        op = x_ref[:, rows[0], :]
                    else:
                        op = jnp.concatenate(
                            [x_ref[:, ih, :] for ih in rows], axis=-1)
                    res = jnp.dot(op.astype(compute_dtype), sel,
                                  preferred_element_type=jnp.float32,
                                  precision=lax.Precision.HIGHEST)
                    o_ref[:, jg * width:(jg + 1) * width] = res.astype(o_ref.dtype)
            else:
                # Small / non-128-alignable level: full slab is VMEM resident
                # across the band axis, one narrow dot + single-row store per
                # output row (tiny data volume, keeps lowering simple).
                for j, ih in enumerate(rel_rows):
                    row = x_ref[:, ih, :].astype(compute_dtype)
                    res = jnp.dot(row, sel,
                                  preferred_element_type=jnp.float32,
                                  precision=lax.Precision.HIGHEST)
                    idx = r * rows_band + j
                    o_ref[:, pl.ds(idx, 1), :] = (
                        res.reshape(res.shape[0], 1, w_out).astype(o_ref.dtype))

    return kernel


@functools.partial(jax.jit, static_argnums=(1,))
def _nearest_resize_fused(target: jnp.ndarray, out_hws):
    """target: (N, C, H_in, W_in) -> tuple of (N, C, H_out, W_out), nearest."""
    n, c, h_in, w_in = target.shape
    dtype = target.dtype
    itemsize = dtype.itemsize
    compute_dtype = jnp.bfloat16 if dtype == jnp.bfloat16 else jnp.float32
    cdt_item = np.dtype(compute_dtype).itemsize

    nc = n * c
    sub = _sublane_pack(itemsize)
    h_outs = tuple(ho for ho, _ in out_hws)

    # ---- generation-aware VMEM sizing (double-buffer accounted) -----------
    vmem_limit = _vmem_limit_bytes()
    per_plane = (h_in * w_in + sum(ho * wo for ho, wo in out_hws)) * itemsize
    slack = 8 * 1024 * 1024                       # selection matrices + misc
    budget = max(4 * 1024 * 1024, vmem_limit - slack) // 2   # /2: double buffering
    cap_planes = max(1, budget // max(per_plane, 1))
    if nc <= cap_planes:
        tile_nc, nc_pad = nc, nc                  # common small-NC case: no padding
    else:
        tile_nc = max(sub, (min(cap_planes, 2048) // sub) * sub)
        nc_pad = _round_up(nc, tile_nc)
    nc_tiles = nc_pad // tile_nc

    # ---- band axis so small-NC workloads still pipeline -------------------
    n_bands = _pick_bands(h_in, h_outs, nc_tiles)
    h_band = h_in // n_bands

    x = target.reshape(nc, h_in, w_in)
    if nc_pad != nc:
        # TODO(synk): handle the ragged last plane tile in-kernel to avoid this copy.
        x = jnp.pad(x, ((0, nc_pad - nc), (0, 0), (0, 0)))

    # ---- per-level static metadata (PyTorch nearest: src = floor(dst*in/out))
    levels = []
    sels = []
    out_shapes = []
    out_specs = []
    for (h_out, w_out) in out_hws:
        rows_band = h_out // n_bands
        hi = [(oh * h_in) // h_out for oh in range(h_out)]
        rel_rows = tuple(hi[:rows_band])          # band-invariant (n_bands | H_in, H_out)
        banded = (n_bands == 1) or (rows_band * w_out) % 128 == 0
        if banded:
            g = _pick_group(rows_band, w_out, w_in, cdt_item)
            sels.append(jnp.asarray(_block_diag_select(w_out, w_in, g),
                                    dtype=compute_dtype))
            out_shapes.append(jax.ShapeDtypeStruct((nc_pad, h_out * w_out), dtype))
            out_specs.append(pl.BlockSpec((tile_nc, rows_band * w_out),
                                          lambda i, r: (i, r)))
        else:
            g = 1
            sels.append(jnp.asarray(_col_select(w_out, w_in), dtype=compute_dtype))
            out_shapes.append(jax.ShapeDtypeStruct((nc_pad, h_out, w_out), dtype))
            out_specs.append(pl.BlockSpec((tile_nc, h_out, w_out),
                                          lambda i, r: (i, 0, 0)))
        levels.append(dict(w_out=w_out, rows_band=rows_band,
                           rel_rows=rel_rows, banded=banded, g=g))

    kernel = _make_fused_kernel(levels, compute_dtype)

    in_specs = [pl.BlockSpec((tile_nc, h_band, w_in), lambda i, r: (i, r, 0))]
    in_specs += [pl.BlockSpec(s.shape, lambda i, r: (0, 0)) for s in sels]

    outs = pl.pallas_call(
        kernel,
        out_shape=tuple(out_shapes),
        grid_spec=pltpu.PrefetchScalarGridSpec(
            num_scalar_prefetch=0,
            grid=(nc_tiles, n_bands),
            in_specs=in_specs,
            out_specs=tuple(out_specs),
        ),
        compiler_params=pltpu.CompilerParams(
            # plane tiles are independent (megacore); resident small levels
            # revisit their output block across bands -> band axis "arbitrary".
            dimension_semantics=("parallel", "arbitrary"),
            vmem_limit_bytes=vmem_limit,
        ),
    )(x, *sels)

    results = []
    for o, (h_out, w_out) in zip(outs, out_hws):
        if nc_pad != nc:
            o = o[:nc]
        results.append(o.reshape(n, c, h_out, w_out))
    return tuple(results)


# --------------------------------------------------------------------------
# module-level forward
# --------------------------------------------------------------------------
def interpolate_to_shapes(preds, target, mode: str = "nearest",
                          align_corners=None):
    """JAX/Pallas port of InterpolateToShapes.forward (2D spatial, nearest)."""
    if mode != "nearest":
        # TODO(synk): linear/bilinear/bicubic/area modes not implemented in-kernel.
        raise NotImplementedError("only mode='nearest' is implemented")
    # align_corners is ignored for mode='nearest' (PyTorch ignores it as well).
    if preds[0].ndim != 4:
        # TODO(synk): 3D volumetric (N, C, D, H, W) targets not implemented.
        raise NotImplementedError("only 2D spatial predictions are supported")

    shapes = tuple(tuple(int(s) for s in p.shape[2:]) for p in preds)
    squeeze_result = False
    if target.ndim == preds[0].ndim - 1:
        target = target[:, None]              # unsqueeze channel dim
        squeeze_result = True

    outs = _nearest_resize_fused(target, shapes)

    if squeeze_result:
        outs = [o[:, 0] for o in outs]
    return list(outs)


def _reference_nearest_nchw(target, out_hw):
    """Pure-JAX reference matching PyTorch nearest semantics."""
    n, c, h_in, w_in = target.shape
    h_out, w_out = out_hw
    hi = (jnp.arange(h_out) * h_in) // h_out
    wi = (jnp.arange(w_out) * w_in) // w_out
    return target[:, :, hi][:, :, :, wi]


if __name__ == "__main__":
    key = jax.random.PRNGKey(0)
    k1, k2, k3, k4 = jax.random.split(key, 4)

    # Predictions: list of NCHW feature maps (only spatial shapes matter).
    # Shapes chosen so the demo exercises BOTH in-kernel paths:
    #   level 0 (8, 32): banded, 128-lane-aligned grouped stores (g=4)
    #   level 1 (4, 16): small resident-slab fallback path
    preds = [
        jax.random.normal(k1, (2, 4, 8, 32), dtype=jnp.float32),
        jax.random.normal(k2, (2, 4, 4, 16), dtype=jnp.float32),
    ]
    # Target with channel dim: (N, C, H, W)
    target = jax.random.normal(k3, (2, 3, 16, 64), dtype=jnp.float32)
    # Target without channel dim (segmentation-style): (N, H, W)
    target_seg = jax.random.randint(k4, (2, 16, 64), 0, 5).astype(jnp.float32)

    outs = interpolate_to_shapes(preds, target)
    outs_seg = interpolate_to_shapes(preds, target_seg)
    jax.block_until_ready(outs)
    jax.block_until_ready(outs_seg)

    # Bit-exact check vs pure-JAX reference of PyTorch nearest semantics
    # (one-hot selection matmul with precision=HIGHEST is exact for f32).
    ok = True
    for o, p in zip(outs, preds):
        ref = _reference_nearest_nchw(target, p.shape[2:])
        ok &= bool(jnp.array_equal(o, ref))
        ok &= o.shape == (target.shape[0], target.shape[1]) + p.shape[2:]
    for o, p in zip(outs_seg, preds):
        ref = _reference_nearest_nchw(target_seg[:, None], p.shape[2:])[:, 0]
        ok &= bool(jnp.array_equal(o, ref))
        ok &= o.shape == (target_seg.shape[0],) + p.shape[2:]

    if ok:
        print("KERNEL_OK")
    else:
        raise SystemExit("mismatch vs reference")
</pallas_src>

<mosaic_0001>
module attributes {stable_mosaic.version = 11 : i64} {
  func.func @kernel(%arg0: i32, %arg1: i32, %arg2: memref<6x8x64xf32, #tpu.memory_space<vmem>>, %arg3: memref<256x128xf32, #tpu.memory_space<vmem>>, %arg4: memref<64x16xf32, #tpu.memory_space<vmem>>, %arg5: memref<6x128xf32, #tpu.memory_space<vmem>>, %arg6: memref<6x4x16xf32, #tpu.memory_space<vmem>>) attributes {dimension_semantics = [#tpu.dimension_semantics<parallel>, #tpu.dimension_semantics<arbitrary>], iteration_bounds = array<i64: 1, 2>, scalar_prefetch = 0 : i64, scratch_operands = 0 : i64, tpu.core_type = #tpu.core_type<tc>, window_params = [{transform_indices = @transform_0, window_bounds = array<i64: 6, 8, 64>}, {pipeline_mode = #tpu.pipeline_mode<synchronous>, transform_indices = @transform_1, window_bounds = array<i64: 256, 128>}, {pipeline_mode = #tpu.pipeline_mode<synchronous>, transform_indices = @transform_2, window_bounds = array<i64: 64, 16>}, {transform_indices = @transform_3, window_bounds = array<i64: 6, 128>}, {transform_indices = @transform_4, window_bounds = array<i64: 6, 4, 16>}]} {
    %c0 = arith.constant 0 : index
    %c0_0 = arith.constant 0 : index
    %0 = vector.load %arg3[%c0, %c0_0] : memref<256x128xf32, #tpu.memory_space<vmem>>, vector<256x128xf32>
    %c0_1 = arith.constant 0 : index
    %c0_2 = arith.constant 0 : index
    %c0_3 = arith.constant 0 : index
    %1 = vector.load %arg2[%c0_1, %c0_2, %c0_3] : memref<6x8x64xf32, #tpu.memory_space<vmem>>, vector<6x1x64xf32>
    %2 = vector.shape_cast %1 : vector<6x1x64xf32> to vector<6x64xf32>
    %c0_4 = arith.constant 0 : index
    %c2 = arith.constant 2 : index
    %c0_5 = arith.constant 0 : index
    %3 = vector.load %arg2[%c0_4, %c2, %c0_5] : memref<6x8x64xf32, #tpu.memory_space<vmem>>, vector<6x1x64xf32>
    %4 = vector.shape_cast %3 : vector<6x1x64xf32> to vector<6x64xf32>
    %c0_6 = arith.constant 0 : index
    %c4 = arith.constant 4 : index
    %c0_7 = arith.constant 0 : index
    %5 = vector.load %arg2[%c0_6, %c4, %c0_7] : memref<6x8x64xf32, #tpu.memory_space<vmem>>, vector<6x1x64xf32>
    %6 = vector.shape_cast %5 : vector<6x1x64xf32> to vector<6x64xf32>
    %c0_8 = arith.constant 0 : index
    %c6 = arith.constant 6 : index
    %c0_9 = arith.constant 0 : index
    %7 = vector.load %arg2[%c0_8, %c6, %c0_9] : memref<6x8x64xf32, #tpu.memory_space<vmem>>, vector<6x1x64xf32>
    %8 = vector.shape_cast %7 : vector<6x1x64xf32> to vector<6x64xf32>
    %9 = tpu.concatenate %2, %4, %6, %8 in 1 : vector<6x64xf32>, vector<6x64xf32>, vector<6x64xf32>, vector<6x64xf32> -> vector<6x256xf32>
    %cst = arith.constant dense<0.000000e+00> : vector<6x128xf32>
    %10 = tpu.matmul %9, %0, %cst {dimension_numbers = #tpu.dot_dimension_numbers<[1], [0], [0], [1], [0, 0, 1, 1], [], []>, precision = #tpu.contract_precision<fp32>} : vector<6x256xf32>, vector<256x128xf32>, vector<6x128xf32> -> vector<6x128xf32>
    %c0_10 = arith.constant 0 : index
    %c0_11 = arith.constant 0 : index
    %11 = vector.load %arg5[%c0_10, %c0_11] : memref<6x128xf32, #tpu.memory_space<vmem>>, vector<6x128xf32>
    tpu.vector_store %arg5[%c0_10, %c0_11], %10 {strides = array<i32>} : memref<6x128xf32, #tpu.memory_space<vmem>>, vector<6x128xf32>,
    %c0_12 = arith.constant 0 : index
    %c0_13 = arith.constant 0 : index
    %12 = vector.load %arg4[%c0_12, %c0_13] : memref<64x16xf32, #tpu.memory_space<vmem>>, vector<64x16xf32>
    %c0_14 = arith.constant 0 : index
    %c0_15 = arith.constant 0 : index
    %c0_16 = arith.constant 0 : index
    %13 = vector.load %arg2[%c0_14, %c0_15, %c0_16] : memref<6x8x64xf32, #tpu.memory_space<vmem>>, vector<6x1x64xf32>
    %14 = vector.shape_cast %13 : vector<6x1x64xf32> to vector<6x64xf32>
    %cst_17 = arith.constant dense<0.000000e+00> : vector<6x16xf32>
    %15 = tpu.matmul %14, %12, %cst_17 {dimension_numbers = #tpu.dot_dimension_numbers<[1], [0], [0], [1], [0, 0, 1, 1], [], []>, precision = #tpu.contract_precision<fp32>} : vector<6x64xf32>, vector<64x16xf32>, vector<6x16xf32> -> vector<6x16xf32>
    %c2_i32 = arith.constant 2 : i32
    %16 = arith.muli %arg1, %c2_i32 : i32
    %c0_i32 = arith.constant 0 : i32
    %17 = arith.addi %16, %c0_i32 : i32
    %18 = vector.shape_cast %15 : vector<6x16xf32> to vector<6x1x16xf32>
    %c0_18 = arith.constant 0 : index
    %19 = arith.index_cast %17 : i32 to index
    %c0_19 = arith.constant 0 : index
    %20 = vector.load %arg6[%c0_18, %19, %c0_19] : memref<6x4x16xf32, #tpu.memory_space<vmem>>, vector<6x1x16xf32>
    tpu.vector_store %arg6[%c0_18, %19, %c0_19], %18 {strides = array<i32>} : memref<6x4x16xf32, #tpu.memory_space<vmem>>, vector<6x1x16xf32>,
    %c0_20 = arith.constant 0 : index
    %c4_21 = arith.constant 4 : index
    %c0_22 = arith.constant 0 : index
    %21 = vector.load %arg2[%c0_20, %c4_21, %c0_22] : memref<6x8x64xf32, #tpu.memory_space<vmem>>, vector<6x1x64xf32>
    %22 = vector.shape_cast %21 : vector<6x1x64xf32> to vector<6x64xf32>
    %cst_23 = arith.constant dense<0.000000e+00> : vector<6x16xf32>
    %23 = tpu.matmul %22, %12, %cst_23 {dimension_numbers = #tpu.dot_dimension_numbers<[1], [0], [0], [1], [0, 0, 1, 1], [], []>, precision = #tpu.contract_precision<fp32>} : vector<6x64xf32>, vector<64x16xf32>, vector<6x16xf32> -> vector<6x16xf32>
    %c2_i32_24 = arith.constant 2 : i32
    %24 = arith.muli %arg1, %c2_i32_24 : i32
    %c1_i32 = arith.constant 1 : i32
    %25 = arith.addi %24, %c1_i32 : i32
    %26 = vector.shape_cast %23 : vector<6x16xf32> to vector<6x1x16xf32>
    %c0_25 = arith.constant 0 : index
    %27 = arith.index_cast %25 : i32 to index
    %c0_26 = arith.constant 0 : index
    %28 = vector.load %arg6[%c0_25, %27, %c0_26] : memref<6x4x16xf32, #tpu.memory_space<vmem>>, vector<6x1x16xf32>
    tpu.vector_store %arg6[%c0_25, %27, %c0_26], %26 {strides = array<i32>} : memref<6x4x16xf32, #tpu.memory_space<vmem>>, vector<6x1x16xf32>,
    return
  }
  func.func @transform_0(%arg0: i32, %arg1: i32) -> (i32, i32, i32) {
    %c0_i32 = arith.constant 0 : i32
    %c0_i32_0 = arith.constant 0 : i32
    return %arg0, %arg1, %c0_i32 : i32, i32, i32
  }
  func.func @transform_1(%arg0: i32, %arg1: i32) -> (i32, i32) {
    %c0_i32 = arith.constant 0 : i32
    %c0_i32_0 = arith.constant 0 : i32
    %c0_i32_1 = arith.constant 0 : i32
    return %c0_i32, %c0_i32_0 : i32, i32
  }
  func.func @transform_2(%arg0: i32, %arg1: i32) -> (i32, i32) {
    %c0_i32 = arith.constant 0 : i32
    %c0_i32_0 = arith.constant 0 : i32
    %c0_i32_1 = arith.constant 0 : i32
    return %c0_i32, %c0_i32_0 : i32, i32
  }
  func.func @transform_3(%arg0: i32, %arg1: i32) -> (i32, i32) {
    %c0_i32 = arith.constant 0 : i32
    return %arg0, %arg1 : i32, i32
  }
  func.func @transform_4(%arg0: i32, %arg1: i32) -> (i32, i32, i32) {
    %c0_i32 = arith.constant 0 : i32
    %c0_i32_0 = arith.constant 0 : i32
    %c0_i32_1 = arith.constant 0 : i32
    return %arg0, %c0_i32, %c0_i32_0 : i32, i32, i32
  }
}

</mosaic_0001>

<llo_original>
// kernel: _nearest_resize_fused.1
$region0: #{_nearest_resize_fused.1}
  #allocation0 [shape = 'u32[]', space=smem, size = 0x4, offset = 0x4, fixed_abs, tag = 'smem constant byte address 0x4 - core index']
  #allocation1 [shape = 'u32[144,128]{1,0:T(1,128)}', space=vmem, size = 0x12000, scoped, tag = 'internal scratch']
  %s0 = inlined_call_operand.hbm [shape: f32[6,16,64], index: 0, kind: input, shape index: {}]
  %s1 = inlined_call_operand.hbm [shape: f32[256,128], index: 1, kind: input, shape index: {}]
  %s2 = inlined_call_operand.hbm [shape: f32[64,16], index: 2, kind: input, shape index: {}]
  %s3 = inlined_call_operand.vmem [shape: f32[6,256], index: 3, kind: output, shape index: {0}]
  %s4 = inlined_call_operand.hbm [shape: f32[6,4,16], index: 4, kind: output, shape index: {1}]
  %5 = xla_tuple %s3, %s4
  %s6 = sld [smem:[#allocation0]]
  $region65: #{_nearest_resize_fused.1} parent=0
    _
  %s8 = ssub.s32 1, %s6
  %s9 = scalar_select 0, %s8, %s6
  $region1: #{_nearest_resize_fused.1} parent=0
    #allocation2 [shape = 'u8[49152]{0}', space=vmem, size = 0xc000, scoped, tag = 'input window, operand 0']
    #allocation3 [shape = 's32[2]{0}', space=sflag, size = 0x8, scoped, tag = 'scoped memory for _nearest_resize_fused.1']
    #allocation4 [shape = 's32[2]{0}', space=sflag, size = 0x8, scoped, tag = 'scoped memory for _nearest_resize_fused.1']
    #allocation5 [shape = 'u8[131072]{0}', space=vmem, size = 0x20000, scoped, tag = 'input window, operand 1, single buffered']
    #allocation6 [shape = 's32[1]{0}', space=sflag, size = 0x4, scoped, tag = 'scoped memory for _nearest_resize_fused.1']
    #allocation7 [shape = 'u8[32768]{0}', space=vmem, size = 0x8000, scoped, tag = 'input window, operand 2, single buffered']
    #allocation8 [shape = 'u8[12288]{0}', space=vmem, size = 0x3000, scoped, tag = 'output window, operand 1, single buffered']
    %10 = vsyncpa [#allocation3], 0
    %s11 = scalar_lea.sflag [#allocation3], 1
    %12 = vsyncpa %s11, 0
    %13 = vsyncpa [#allocation6], 0
    %14 = vsyncpa [#allocation4], 0
    loop: start=0, step=1, limit=4
    $region2: #{_nearest_resize_fused.1} parent=1 // loop_pre_header
      _
    $region3: #{_nearest_resize_fused.1} parent=1 // loop_header
      %s16 = sphi 0, %s20
      %p17 = scmp.ge.s32.totalorder %s16, 4
      %s23 = sphi 0, %s35
      %s24 = sphi 0, %s31
      %s25 = sphi 0, %s23
      %s26 = sphi 0, %s24
      %s27 = sphi 0, %s25
      %s28 = sphi 0, %s26
      %s40 = sphi 0, %s42
      %s43 = sphi 0, %s40
      %s44 = sphi 0, %s43
      %s60 = sphi 0, %s44
      %s64 = sphi 0, %s64
      %s66 = sphi 0, %s64
      %s67 = sphi 0, %s66
      %s81 = sphi 0, %s67
      %s85 = sphi 0, %s85
      %s87 = sphi 0, %s85
      %s88 = sphi 0, %s87
      %s102 = sphi 0, %s88
      %s110 = sphi 0, %s112
      %s113 = sphi 0, %s110
      %s114 = sphi 0, %s113
      %s130 = sphi 0, %s114
      %s136 = sphi 0, %s138
      %s139 = sphi 0, %s136
      %s140 = sphi 0, %s139
      %s156 = sphi 0, %s140
    $region4: #{_nearest_resize_fused.1} parent=1 // loop_header_branch
      %19 = sbr.rel (%p17) target = $region8
    $region5: #{_nearest_resize_fused.1} parent=1 // loop_body
      %s21 = ssub.s32 %s16, 1
      %s22 = ssub.s32 %s16, 2
      %s29 = sadd.s32 1, %s24
      %p30 = scmp.ge.s32.totalorder %s29, 2
      %s31 = scalar_select %p30, 0, %s29
      %s32 = sadd.s32 1, %s23
      %s33 = scalar_select %p30, %s32, %s23
      %p34 = scmp.ge.s32.totalorder %s33, 1
      %s35 = scalar_select %p34, 0, %s33
      %s36 = ssub.s32 %s23, %s35
      %s37 = ssub.s32 %s24, %s31
      %s38 = sor.u32 %s36, %s37
      %p39 = scmp.eq.s32.totalorder %s38, 0
      %s41 = sadd.s32 %s40, 1
      %s42 = scalar_select %p39, %s40, %s41
      %p45 = pneg %p39
      %p46 = scmp.eq.s32.totalorder %s16, 1
      %p47 = por %p45, %p46
      %p48 = scmp.ne.s32.totalorder %s40, %s43
      %p49 = scmp.eq.s32.totalorder %s16, 0
      %p50 = por %p48, %p49
      %p51 = scmp.ne.s32.totalorder %s40, %s43
      %p52 = scmp.eq.s32.totalorder %s21, 1
      %p53 = por %p51, %p52
      %p54 = scmp.ne.s32.totalorder %s43, %s44
      %p55 = scmp.eq.s32.totalorder %s21, 0
      %p56 = por %p54, %p55
      %p57 = scmp.ne.s32.totalorder %s43, %s44
      %p58 = scmp.eq.s32.totalorder %s22, 1
      %p59 = por %p57, %p58
      %p61 = scmp.ne.s32.totalorder %s44, %s60
      %p62 = scmp.eq.s32.totalorder %s22, 0
      %p63 = por %p61, %p62
      %s65 = sadd.s32 %s64, 1
      %p68 = scmp.eq.s32.totalorder %s16, 1
      %p69 = scmp.ne.s32.totalorder %s64, %s66
      %p70 = scmp.eq.s32.totalorder %s16, 0
      %p71 = por %p69, %p70
      %p72 = scmp.ne.s32.totalorder %s64, %s66
      %p73 = scmp.eq.s32.totalorder %s21, 1
      %p74 = por %p72, %p73
      %p75 = scmp.ne.s32.totalorder %s66, %s67
      %p76 = scmp.eq.s32.totalorder %s21, 0
      %p77 = por %p75, %p76
      %p78 = scmp.ne.s32.totalorder %s66, %s67
      %p79 = scmp.eq.s32.totalorder %s22, 1
      %p80 = por %p78, %p79
      %p82 = scmp.ne.s32.totalorder %s67, %s81
      %p83 = scmp.eq.s32.totalorder %s22, 0
      %p84 = por %p82, %p83
      %s86 = sadd.s32 %s85, 1
      %p89 = scmp.eq.s32.totalorder %s16, 1
      %p90 = scmp.ne.s32.totalorder %s85, %s87
      %p91 = scmp.eq.s32.totalorder %s16, 0
      %p92 = por %p90, %p91
      %p93 = scmp.ne.s32.totalorder %s85, %s87
      %p94 = scmp.eq.s32.totalorder %s21, 1
      %p95 = por %p93, %p94
      %p96 = scmp.ne.s32.totalorder %s87, %s88
      %p97 = scmp.eq.s32.totalorder %s21, 0
      %p98 = por %p96, %p97
      %p99 = scmp.ne.s32.totalorder %s87, %s88
      %p100 = scmp.eq.s32.totalorder %s22, 1
      %p101 = por %p99, %p100
      %p103 = scmp.ne.s32.totalorder %s88, %s102
      %p104 = scmp.eq.s32.totalorder %s22, 0
      %p105 = por %p103, %p104
      %s106 = ssub.s32 %s23, %s35
      %s107 = ssub.s32 %s24, %s31
      %s108 = sor.u32 %s106, %s107
      %p109 = scmp.eq.s32.totalorder %s108, 0
      %s111 = sadd.s32 %s110, 1
      %s112 = scalar_select %p109, %s110, %s111
      %p115 = pneg %p109
      %p116 = scmp.eq.s32.totalorder %s16, 1
      %p117 = por %p115, %p116
      %p118 = scmp.ne.s32.totalorder %s110, %s113
      %p119 = scmp.eq.s32.totalorder %s16, 0
      %p120 = por %p118, %p119
      %p121 = scmp.ne.s32.totalorder %s110, %s113
      %p122 = scmp.eq.s32.totalorder %s21, 1
      %p123 = por %p121, %p122
      %p124 = scmp.ne.s32.totalorder %s113, %s114
      %p125 = scmp.eq.s32.totalorder %s21, 0
      %p126 = por %p124, %p125
      %p127 = scmp.ne.s32.totalorder %s113, %s114
      %p128 = scmp.eq.s32.totalorder %s22, 1
      %p129 = por %p127, %p128
      %p131 = scmp.ne.s32.totalorder %s114, %s130
      %p132 = scmp.eq.s32.totalorder %s22, 0
      %p133 = por %p131, %p132
      %s134 = ssub.s32 %s23, %s35
      %p135 = scmp.eq.s32.totalorder %s134, 0
      %s137 = sadd.s32 %s136, 1
      %s138 = scalar_select %p135, %s136, %s137
      %p141 = pneg %p135
      %p142 = scmp.eq.s32.totalorder %s16, 1
      %p143 = por %p141, %p142
      %p144 = scmp.ne.s32.totalorder %s136, %s139
      %p145 = scmp.eq.s32.totalorder %s16, 0
      %p146 = por %p144, %p145
      %p147 = scmp.ne.s32.totalorder %s136, %s139
      %p148 = scmp.eq.s32.totalorder %s21, 1
      %p149 = por %p147, %p148
      %p150 = scmp.ne.s32.totalorder %s139, %s140
      %p151 = scmp.eq.s32.totalorder %s21, 0
      %p152 = por %p150, %p151
      %p153 = scmp.ne.s32.totalorder %s139, %s140
      %p154 = scmp.eq.s32.totalorder %s22, 1
      %p155 = por %p153, %p154
      %p157 = scmp.ne.s32.totalorder %s140, %s156
      %p158 = scmp.eq.s32.totalorder %s22, 0
      %p159 = por %p157, %p158
      %p160 = scmp.le.s32.totalorder 1, %s16
      %p161 = scmp.lt.s32.totalorder %s16, 3
      %p162 = pnand %p160, %p161
      %p163 = pneg %p162
      // Predicated region
      $region9: #{_nearest_resize_fused.1} parent=5 // pred_check
        _
      $region10: #{_nearest_resize_fused.1} parent=5 // pred_check_branch
        %165 = sbr.rel (%p162) target = $region12
      $region11: #{_nearest_resize_fused.1} parent=5 // pred_region
        %s166 = ssub.s32 %s16, 1
        // Predicated region
        $region13: #{_nearest_resize_fused.1} parent=11 // pred_check
          %p167 = pneg %p77
        $region14: #{_nearest_resize_fused.1} parent=11 // pred_check_branch
          %169 = sbr.rel (%p167) target = $region16
        $region15: #{_nearest_resize_fused.1} parent=11 // pred_region
          %s171 = ssub.s32 4096, 4096
          %172 = vsyncadd [#allocation6], %s171
          %s173 = sshll.u32 [#allocation5], 4
          %s174 = int_to_ptr.vmem [resolvable:$true] %s173
          %179 = dma.hbm_to_vmem [thread:$0]  %s1, 4096, %s174, [#allocation6], 128, 128, 8
        $region16: #{_nearest_resize_fused.1} parent=11 // pred_fallthru
          _
        // Predicated region
        $region17: #{_nearest_resize_fused.1} parent=11 // pred_check
          %p180 = pneg %p98
        $region18: #{_nearest_resize_fused.1} parent=11 // pred_check_branch
          %182 = sbr.rel (%p180) target = $region20
        $region19: #{_nearest_resize_fused.1} parent=11 // pred_region
          %s184 = ssub.s32 1024, 1024
          %185 = vsyncadd [#allocation6], %s184
          %s186 = sshll.u32 [#allocation7], 4
          %s187 = int_to_ptr.vmem [resolvable:$true] %s186
          %192 = dma.hbm_to_vmem [thread:$0]  %s2, 1024, %s187, [#allocation6], 128, 128, 8
        $region20: #{_nearest_resize_fused.1} parent=11 // pred_fallthru
          _
      $region12: #{_nearest_resize_fused.1} parent=5 // pred_fallthru
        _
      %p193 = scmp.lt.s32.totalorder %s16, 2
      // Predicated region
      $region21: #{_nearest_resize_fused.1} parent=5 // pred_check
        %p194 = pneg %p193
      $region22: #{_nearest_resize_fused.1} parent=5 // pred_check_branch
        %196 = sbr.rel (%p194) target = $region24
      $region23: #{_nearest_resize_fused.1} parent=5 // pred_region
        // Predicated region
        $region25: #{_nearest_resize_fused.1} parent=23 // pred_check
          %p197 = pneg %p50
        $region26: #{_nearest_resize_fused.1} parent=23 // pred_check_branch
          %199 = sbr.rel (%p197) target = $region28
        $region27: #{_nearest_resize_fused.1} parent=23 // pred_region
          %s200 = sand.u32 %s40, 1
          %s201 = scalar_lea.sflag [#allocation3], %s200
          %s202 = sand.u32 %s40, 1
          %s203 = smul.addr %s202, 48
          %s204 = scalar_lea.vmem [#allocation2], %s203
          %s205 = smul.u32 6, %s23
          %s207 = ssub.s32 768, 768
          %208 = vsyncadd %s201, %s207
          %s209 = smul.addr %s205, 2
          %s210 = sadd.s32 %s24, %s209
          %s211 = smul.addr %s210, 128
          %s212 = scalar_lea.hbm %s0, %s211
          %s213 = sshll.u32 %s204, 4
          %s214 = int_to_ptr.vmem [resolvable:$true] %s213
          %219 = dma.hbm_to_vmem [thread:$0]  %s212, 768, %s214, %s201, 256, 128, 8
        $region28: #{_nearest_resize_fused.1} parent=23 // pred_fallthru
          _
      $region24: #{_nearest_resize_fused.1} parent=5 // pred_fallthru
        _
      %p220 = scmp.le.s32.totalorder 1, %s16
      %p221 = scmp.lt.s32.totalorder %s16, 3
      %p222 = pnand %p220, %p221
      %p223 = pneg %p222
      // Predicated region
      $region29: #{_nearest_resize_fused.1} parent=5 // pred_check
        _
      $region30: #{_nearest_resize_fused.1} parent=5 // pred_check_branch
        %225 = sbr.rel (%p222) target = $region32
      $region31: #{_nearest_resize_fused.1} parent=5 // pred_region
        %s226 = ssub.s32 %s16, 1
        %s227 = sand.u32 %s43, 1
        %s228 = scalar_lea.sflag [#allocation3], %s227
        %s229 = sand.u32 %s43, 1
        %s230 = smul.addr %s229, 48
        %s231 = scalar_lea.vmem [#allocation2], %s230
        // Predicated region
        $region33: #{_nearest_resize_fused.1} parent=31 // pred_check
          %p232 = pneg %p56
        $region34: #{_nearest_resize_fused.1} parent=31 // pred_check_branch
          %234 = sbr.rel (%p232) target = $region36
        $region35: #{_nearest_resize_fused.1} parent=31 // pred_region
          %235 = dma.done %s228, 768
        $region36: #{_nearest_resize_fused.1} parent=31 // pred_fallthru
          _
        // Predicated region
        $region37: #{_nearest_resize_fused.1} parent=31 // pred_check
          %p236 = pneg %p77
        $region38: #{_nearest_resize_fused.1} parent=31 // pred_check_branch
          %238 = sbr.rel (%p236) target = $region40
        $region39: #{_nearest_resize_fused.1} parent=31 // pred_region
          %239 = dma.done [#allocation6], 4096
        $region40: #{_nearest_resize_fused.1} parent=31 // pred_fallthru
          _
        // Predicated region
        $region41: #{_nearest_resize_fused.1} parent=31 // pred_check
          %p240 = pneg %p98
        $region42: #{_nearest_resize_fused.1} parent=31 // pred_check_branch
          %242 = sbr.rel (%p240) target = $region44
        $region43: #{_nearest_resize_fused.1} parent=31 // pred_region
          %243 = dma.done [#allocation6], 1024
        $region44: #{_nearest_resize_fused.1} parent=31 // pred_fallthru
          _
        %s244 = sand.u32 %s43, 1
        %s245 = scalar_lea.sflag [#allocation3], %s244
        %s246 = sand.u32 %s43, 1
        %s247 = smul.addr %s246, 48
        %s248 = scalar_lea.vmem [#allocation2], %s247
        %p249 = pneg %p56
        %p250 = pneg %p53
        %p251 = pneg %p77
        %p252 = pneg %p74
        %p253 = pneg %p98
        %p254 = pneg %p95
        %p255 = pneg %p126
        %p256 = pneg %p123
        %p257 = scmp.lt.s32.totalorder %s25, 0
        %s258 = scalar_select %p257, %s25, 0
        %p259 = scmp.lt.s32.totalorder %s26, 1
        %s260 = scalar_select %p259, %s26, 1
        %s261 = smul.addr %s258, 2
        %s262 = sadd.s32 %s260, %s261
        %s263 = smul.addr %s262, 8
        %s264 = scalar_lea.vmem %s3, %s263
        %p265 = pneg %p152
        %p266 = pneg %p149
        %s267 = smul.u32 6, %s25
        %p268 = scmp.lt.s32.totalorder %s25, 0
        %s269 = scalar_select %p268, %s25, 0
        %p270 = scmp.lt.s32.totalorder %s26, 1
        %s271 = scalar_select %p270, %s26, 1
        %s272 = smul.addr %s269, 2
        %s273 = sadd.s32 %s271, %s272
        %s274 = smul.addr %s273, 8
        %s275 = scalar_lea.vmem %s3, %s274
        %s276 = smul.u32 6, %s25
        %v277 = vld [vmem:[#allocation5] sm:$0xff]
        %v278 = vld [vmem:[#allocation5 + $0x8] sm:$0xff]
        %v279 = vld [vmem:[#allocation5 + $0x10] sm:$0xff]
        %v280 = vld [vmem:[#allocation5 + $0x18] sm:$0xff]
        %v281 = vld [vmem:[#allocation5 + $0x20] sm:$0xff]
        %v282 = vld [vmem:[#allocation5 + $0x28] sm:$0xff]
        %v283 = vld [vmem:[#allocation5 + $0x30] sm:$0xff]
        %v284 = vld [vmem:[#allocation5 + $0x38] sm:$0xff]
        %v285 = vld [vmem:[#allocation5 + $0x40] sm:$0xff]
        %v286 = vld [vmem:[#allocation5 + $0x48] sm:$0xff]
        %v287 = vld [vmem:[#allocation5 + $0x50] sm:$0xff]
        %v288 = vld [vmem:[#allocation5 + $0x58] sm:$0xff]
        %v289 = vld [vmem:[#allocation5 + $0x60] sm:$0xff]
        %v290 = vld [vmem:[#allocation5 + $0x68] sm:$0xff]
        %v291 = vld [vmem:[#allocation5 + $0x70] sm:$0xff]
        %v292 = vld [vmem:[#allocation5 + $0x78] sm:$0xff]
        %v293 = vld [vmem:[#allocation5 + $0x80] sm:$0xff]
        %v294 = vld [vmem:[#allocation5 + $0x88] sm:$0xff]
        %v295 = vld [vmem:[#allocation5 + $0x90] sm:$0xff]
        %v296 = vld [vmem:[#allocation5 + $0x98] sm:$0xff]
        %v297 = vld [vmem:[#allocation5 + $0xa0] sm:$0xff]
        %v298 = vld [vmem:[#allocation5 + $0xa8] sm:$0xff]
        %v299 = vld [vmem:[#allocation5 + $0xb0] sm:$0xff]
        %v300 = vld [vmem:[#allocation5 + $0xb8] sm:$0xff]
        %v301 = vld [vmem:[#allocation5 + $0xc0] sm:$0xff]
        %v302 = vld [vmem:[#allocation5 + $0xc8] sm:$0xff]
        %v303 = vld [vmem:[#allocation5 + $0xd0] sm:$0xff]
        %v304 = vld [vmem:[#allocation5 + $0xd8] sm:$0xff]
        %v305 = vld [vmem:[#allocation5 + $0xe0] sm:$0xff]
        %v306 = vld [vmem:[#allocation5 + $0xe8] sm:$0xff]
        %v307 = vld [vmem:[#allocation5 + $0xf0] sm:$0xff]
        %v308 = vld [vmem:[#allocation5 + $0xf8] sm:$0xff]
        %v309 = vld [vmem:[%s231] sm:$0x1]
        %v310 = vld [vmem:[%s231 + $0x8] sm:$0x1]
        %v311 = vld [vmem:[%s231 + $0x10] sm:$0x1]
        %v312 = vld [vmem:[%s231 + $0x18] sm:$0x1]
        %v313 = vld [vmem:[%s231 + $0x20] sm:$0x1]
        %v314 = vld [vmem:[%s231 + $0x28] sm:$0x1]
        %v315 = vld [vmem:[%s231 + $0x2] sm:$0x1]
        %v316 = vld [vmem:[%s231 + $0xa] sm:$0x1]
        %v317 = vld [vmem:[%s231 + $0x12] sm:$0x1]
        %v318 = vld [vmem:[%s231 + $0x1a] sm:$0x1]
        %v319 = vld [vmem:[%s231 + $0x22] sm:$0x1]
        %v320 = vld [vmem:[%s231 + $0x2a] sm:$0x1]
        %v321 = vld [vmem:[%s231 + $0x4] sm:$0x1]
        %v322 = vld [vmem:[%s231 + $0xc] sm:$0x1]
        %v323 = vld [vmem:[%s231 + $0x14] sm:$0x1]
        %v324 = vld [vmem:[%s231 + $0x1c] sm:$0x1]
        %v325 = vld [vmem:[%s231 + $0x24] sm:$0x1]
        %v326 = vld [vmem:[%s231 + $0x2c] sm:$0x1]
        %v327 = vld [vmem:[%s231 + $0x6] sm:$0x1]
        %v328 = vld [vmem:[%s231 + $0xe] sm:$0x1]
        %v329 = vld [vmem:[%s231 + $0x16] sm:$0x1]
        %v330 = vld [vmem:[%s231 + $0x1e] sm:$0x1]
        %v331 = vld [vmem:[%s231 + $0x26] sm:$0x1]
        %v332 = vld [vmem:[%s231 + $0x2e] sm:$0x1]
        %v339 = vrot.slane %v310, 7
        %vm340 = vcmask 1041409
        %v341 = vsel %vm340, %v339, %v309
        %v342 = vrot.slane %v311, 6
        %vm343 = vcmask 1042434
        %v344 = vsel %vm343, %v342, %v341
        %v345 = vrot.slane %v312, 5
        %vm346 = vcmask 1043459
        %v347 = vsel %vm346, %v345, %v344
        %v348 = vrot.slane %v313, 4
        %vm349 = vcmask 1044484
        %v350 = vsel %vm349, %v348, %v347
        %v351 = vrot.slane %v314, 3
        %vm352 = vcmask 1045509
        %v353 = vsel %vm352, %v351, %v350
        %v361 = vrot.slane %v316, 7
        %v362 = vsel %vm340, %v361, %v315
        %v363 = vrot.slane %v317, 6
        %v364 = vsel %vm343, %v363, %v362
        %v365 = vrot.slane %v318, 5
        %v366 = vsel %vm346, %v365, %v364
        %v367 = vrot.slane %v319, 4
        %v368 = vsel %vm349, %v367, %v366
        %v369 = vrot.slane %v320, 3
        %v370 = vsel %vm352, %v369, %v368
        %371 = vrot.lane.b32.xlu0 %v370, 64
        %v372 = vpop.permute.xlu0 %371
        %v380 = vrot.slane %v322, 7
        %v381 = vsel %vm340, %v380, %v321
        %v382 = vrot.slane %v323, 6
        %v383 = vsel %vm343, %v382, %v381
        %v384 = vrot.slane %v324, 5
        %v385 = vsel %vm346, %v384, %v383
        %v386 = vrot.slane %v325, 4
        %v387 = vsel %vm349, %v386, %v385
        %v388 = vrot.slane %v326, 3
        %v389 = vsel %vm352, %v388, %v387
        %v397 = vrot.slane %v328, 7
        %v398 = vsel %vm340, %v397, %v327
        %v399 = vrot.slane %v329, 6
        %v400 = vsel %vm343, %v399, %v398
        %v401 = vrot.slane %v330, 5
        %v402 = vsel %vm346, %v401, %v400
        %v403 = vrot.slane %v331, 4
        %v404 = vsel %vm349, %v403, %v402
        %v405 = vrot.slane %v332, 3
        %v406 = vsel %vm352, %v405, %v404
        %407 = vrot.lane.b32.xlu0 %v406, 64
        %v408 = vpop.permute.xlu0 %407
        %vm410 = vcmask 523264
        %v411 = vsel %vm410, %v353, %v372
        %v412 = vsel %vm410, %v389, %v408
        %413 = vmatprep.subr.mxu0 0.0
        %v414 = vand.u32 %v292, 4294901760
        %415 = vmatpush1.msra.mxu0 %v414
        %416 = vmatprep.subr.mxu0 0.0
        %v417 = vand.u32 %v291, 4294901760
        %418 = vmatpush1.msra.mxu0 %v417
        %419 = vmatprep.subr.mxu0 0.0
        %v420 = vand.u32 %v290, 4294901760
        %421 = vmatpush1.msra.mxu0 %v420
        %422 = vmatprep.subr.mxu0 0.0
        %v423 = vand.u32 %v289, 4294901760
        %424 = vmatpush1.msra.mxu0 %v423
        %425 = vmatprep.subr.mxu0 0.0
        %v426 = vand.u32 %v288, 4294901760
        %427 = vmatpush1.msra.mxu0 %v426
        %428 = vmatprep.subr.mxu0 0.0
        %v429 = vand.u32 %v287, 4294901760
        %430 = vmatpush1.msra.mxu0 %v429
        %431 = vmatprep.subr.mxu0 0.0
        %v432 = vand.u32 %v286, 4294901760
        %433 = vmatpush1.msra.mxu0 %v432
        %434 = vmatprep.subr.mxu0 0.0
        %v435 = vand.u32 %v285, 4294901760
        %436 = vmatpush1.msra.mxu0 %v435
        %437 = vmatprep.subr.mxu0 0.0
        %v438 = vand.u32 %v284, 4294901760
        %439 = vmatpush1.msra.mxu0 %v438
        %440 = vmatprep.subr.mxu0 0.0
        %v441 = vand.u32 %v283, 4294901760
        %442 = vmatpush1.msra.mxu0 %v441
        %443 = vmatprep.subr.mxu0 0.0
        %v444 = vand.u32 %v282, 4294901760
        %445 = vmatpush1.msra.mxu0 %v444
        %446 = vmatprep.subr.mxu0 0.0
        %v447 = vand.u32 %v281, 4294901760
        %448 = vmatpush1.msra.mxu0 %v447
        %449 = vmatprep.subr.mxu0 0.0
        %v450 = vand.u32 %v280, 4294901760
        %451 = vmatpush1.msra.mxu0 %v450
        %452 = vmatprep.subr.mxu0 0.0
        %v453 = vand.u32 %v279, 4294901760
        %454 = vmatpush1.msra.mxu0 %v453
        %455 = vmatprep.subr.mxu0 0.0
        %v456 = vand.u32 %v278, 4294901760
        %457 = vmatpush1.msra.mxu0 %v456
        %458 = vmatprep.subr.mxu0 0.0
        %v459 = vand.u32 %v277, 4294901760
        %460 = vmatpush1.msra.mxu0 %v459
        %461 = vmatprep.subr.mxu0 0.0
        %v462 = vand.u32 %v308, 4294901760
        %463 = vmatpush2.msra.mxu0 %v462
        %464 = vmatprep.subr.mxu0 0.0
        %v465 = vand.u32 %v307, 4294901760
        %466 = vmatpush2.msra.mxu0 %v465
        %467 = vmatprep.subr.mxu0 0.0
        %v468 = vand.u32 %v306, 4294901760
        %469 = vmatpush2.msra.mxu0 %v468
        %470 = vmatprep.subr.mxu0 0.0
        %v471 = vand.u32 %v305, 4294901760
        %472 = vmatpush2.msra.mxu0 %v471
        %473 = vmatprep.subr.mxu0 0.0
        %v474 = vand.u32 %v304, 4294901760
        %475 = vmatpush2.msra.mxu0 %v474
        %476 = vmatprep.subr.mxu0 0.0
        %v477 = vand.u32 %v303, 4294901760
        %478 = vmatpush2.msra.mxu0 %v477
        %479 = vmatprep.subr.mxu0 0.0
        %v480 = vand.u32 %v302, 4294901760
        %481 = vmatpush2.msra.mxu0 %v480
        %482 = vmatprep.subr.mxu0 0.0
        %v483 = vand.u32 %v301, 4294901760
        %484 = vmatpush2.msra.mxu0 %v483
        %485 = vmatprep.subr.mxu0 0.0
        %v486 = vand.u32 %v300, 4294901760
        %487 = vmatpush2.msra.mxu0 %v486
        %488 = vmatprep.subr.mxu0 0.0
        %v489 = vand.u32 %v299, 4294901760
        %490 = vmatpush2.msra.mxu0 %v489
        %491 = vmatprep.subr.mxu0 0.0
        %v492 = vand.u32 %v298, 4294901760
        %493 = vmatpush2.msra.mxu0 %v492
        %494 = vmatprep.subr.mxu0 0.0
        %v495 = vand.u32 %v297, 4294901760
        %496 = vmatpush2.msra.mxu0 %v495
        %497 = vmatprep.subr.mxu0 0.0
        %v498 = vand.u32 %v296, 4294901760
        %499 = vmatpush2.msra.mxu0 %v498
        %500 = vmatprep.subr.mxu0 0.0
        %v501 = vand.u32 %v295, 4294901760
        %502 = vmatpush2.msra.mxu0 %v501
        %503 = vmatprep.subr.mxu0 0.0
        %v504 = vand.u32 %v294, 4294901760
        %505 = vmatpush2.msra.mxu0 %v504
        %506 = vmatprep.subr.mxu0 0.0
        %v507 = vand.u32 %v293, 4294901760
        %508 = vmatpush2.msra.mxu0 %v507
        %v509 = vand.u32 %v412, 4294901760
        %v510 = vsub.f32 %v412, %v509
        %v511 = vand.u32 %v510, 4294901760
        %v512 = vsub.f32 %v510, %v511
        %v513 = vand.u32 %v512, 4294901760
        %514 = vmatprep.mubr.f32.mxu0 %v513
        %v515 = vand.u32 %v411, 4294901760
        %v516 = vsub.f32 %v411, %v515
        %v517 = vand.u32 %v516, 4294901760
        %v518 = vsub.f32 %v516, %v517
        %v519 = vand.u32 %v518, 4294901760
        %520 = vmatmul.mubr.f32.gmra.mxu0 %v519
        %v521 = vpop.f32.mrf.mxu0
        %v522 = vadd.f32 0.0, %v521
        %v523 = vpop.f32.mrf.mxu0
        %524 = vdwg.mxu0
        %525 = vmatprep.subr.mxu0 0.0
        %v526 = vand.u32 %v292, 4294901760
        %v527 = vsub.f32 %v292, %v526
        %v528 = vand.u32 %v527, 4294901760
        %v529 = vsub.f32 %v527, %v528
        %v530 = vand.u32 %v529, 4294901760
        %531 = vmatpush1.msra.mxu0 %v530
        %532 = vmatprep.subr.mxu0 0.0
        %v533 = vand.u32 %v291, 4294901760
        %v534 = vsub.f32 %v291, %v533
        %v535 = vand.u32 %v534, 4294901760
        %v536 = vsub.f32 %v534, %v535
        %v537 = vand.u32 %v536, 4294901760
        %538 = vmatpush1.msra.mxu0 %v537
        %539 = vmatprep.subr.mxu0 0.0
        %v540 = vand.u32 %v290, 4294901760
        %v541 = vsub.f32 %v290, %v540
        %v542 = vand.u32 %v541, 4294901760
        %v543 = vsub.f32 %v541, %v542
        %v544 = vand.u32 %v543, 4294901760
        %545 = vmatpush1.msra.mxu0 %v544
        %546 = vmatprep.subr.mxu0 0.0
        %v547 = vand.u32 %v289, 4294901760
        %v548 = vsub.f32 %v289, %v547
        %v549 = vand.u32 %v548, 4294901760
        %v550 = vsub.f32 %v548, %v549
        %v551 = vand.u32 %v550, 4294901760
        %552 = vmatpush1.msra.mxu0 %v551
        %553 = vmatprep.subr.mxu0 0.0
        %v554 = vand.u32 %v288, 4294901760
        %v555 = vsub.f32 %v288, %v554
        %v556 = vand.u32 %v555, 4294901760
        %v557 = vsub.f32 %v555, %v556
        %v558 = vand.u32 %v557, 4294901760
        %559 = vmatpush1.msra.mxu0 %v558
        %560 = vmatprep.subr.mxu0 0.0
        %v561 = vand.u32 %v287, 4294901760
        %v562 = vsub.f32 %v287, %v561
        %v563 = vand.u32 %v562, 4294901760
        %v564 = vsub.f32 %v562, %v563
        %v565 = vand.u32 %v564, 4294901760
        %566 = vmatpush1.msra.mxu0 %v565
        %567 = vmatprep.subr.mxu0 0.0
        %v568 = vand.u32 %v286, 4294901760
        %v569 = vsub.f32 %v286, %v568
        %v570 = vand.u32 %v569, 4294901760
        %v571 = vsub.f32 %v569, %v570
        %v572 = vand.u32 %v571, 4294901760
        %573 = vmatpush1.msra.mxu0 %v572
        %574 = vmatprep.subr.mxu0 0.0
        %v575 = vand.u32 %v285, 4294901760
        %v576 = vsub.f32 %v285, %v575
        %v577 = vand.u32 %v576, 4294901760
        %v578 = vsub.f32 %v576, %v577
        %v579 = vand.u32 %v578, 4294901760
        %580 = vmatpush1.msra.mxu0 %v579
        %581 = vmatprep.subr.mxu0 0.0
        %v582 = vand.u32 %v284, 4294901760
        %v583 = vsub.f32 %v284, %v582
        %v584 = vand.u32 %v583, 4294901760
        %v585 = vsub.f32 %v583, %v584
        %v586 = vand.u32 %v585, 4294901760
        %587 = vmatpush1.msra.mxu0 %v586
        %588 = vmatprep.subr.mxu0 0.0
        %v589 = vand.u32 %v283, 4294901760
        %v590 = vsub.f32 %v283, %v589
        %v591 = vand.u32 %v590, 4294901760
        %v592 = vsub.f32 %v590, %v591
        %v593 = vand.u32 %v592, 4294901760
        %594 = vmatpush1.msra.mxu0 %v593
        %595 = vmatprep.subr.mxu0 0.0
        %v596 = vand.u32 %v282, 4294901760
        %v597 = vsub.f32 %v282, %v596
        %v598 = vand.u32 %v597, 4294901760
        %v599 = vsub.f32 %v597, %v598
        %v600 = vand.u32 %v599, 4294901760
        %601 = vmatpush1.msra.mxu0 %v600
        %602 = vmatprep.subr.mxu0 0.0
        %v603 = vand.u32 %v281, 4294901760
        %v604 = vsub.f32 %v281, %v603
        %v605 = vand.u32 %v604, 4294901760
        %v606 = vsub.f32 %v604, %v605
        %v607 = vand.u32 %v606, 4294901760
        %608 = vmatpush1.msra.mxu0 %v607
        %609 = vmatprep.subr.mxu0 0.0
        %v610 = vand.u32 %v280, 4294901760
        %v611 = vsub.f32 %v280, %v610
        %v612 = vand.u32 %v611, 4294901760
        %v613 = vsub.f32 %v611, %v612
        %v614 = vand.u32 %v613, 4294901760
        %615 = vmatpush1.msra.mxu0 %v614
        %616 = vmatprep.subr.mxu0 0.0
        %v617 = vand.u32 %v279, 4294901760
        %v618 = vsub.f32 %v279, %v617
        %v619 = vand.u32 %v618, 4294901760
        %v620 = vsub.f32 %v618, %v619
        %v621 = vand.u32 %v620, 4294901760
        %622 = vmatpush1.msra.mxu0 %v621
        %623 = vmatprep.subr.mxu0 0.0
        %v624 = vand.u32 %v278, 4294901760
        %v625 = vsub.f32 %v278, %v624
        %v626 = vand.u32 %v625, 4294901760
        %v627 = vsub.f32 %v625, %v626
        %v628 = vand.u32 %v627, 4294901760
        %629 = vmatpush1.msra.mxu0 %v628
        %630 = vmatprep.subr.mxu0 0.0
        %v631 = vand.u32 %v277, 4294901760
        %v632 = vsub.f32 %v277, %v631
        %v633 = vand.u32 %v632, 4294901760
        %v634 = vsub.f32 %v632, %v633
        %v635 = vand.u32 %v634, 4294901760
        %636 = vmatpush1.msra.mxu0 %v635
        %637 = vmatprep.subr.mxu0 0.0
        %v638 = vand.u32 %v308, 4294901760
        %v639 = vsub.f32 %v308, %v638
        %v640 = vand.u32 %v639, 4294901760
        %v641 = vsub.f32 %v639, %v640
        %v642 = vand.u32 %v641, 4294901760
        %643 = vmatpush2.msra.mxu0 %v642
        %644 = vmatprep.subr.mxu0 0.0
        %v645 = vand.u32 %v307, 4294901760
        %v646 = vsub.f32 %v307, %v645
        %v647 = vand.u32 %v646, 4294901760
        %v648 = vsub.f32 %v646, %v647
        %v649 = vand.u32 %v648, 4294901760
        %650 = vmatpush2.msra.mxu0 %v649
        %651 = vmatprep.subr.mxu0 0.0
        %v652 = vand.u32 %v306, 4294901760
        %v653 = vsub.f32 %v306, %v652
        %v654 = vand.u32 %v653, 4294901760
        %v655 = vsub.f32 %v653, %v654
        %v656 = vand.u32 %v655, 4294901760
        %657 = vmatpush2.msra.mxu0 %v656
        %658 = vmatprep.subr.mxu0 0.0
        %v659 = vand.u32 %v305, 4294901760
        %v660 = vsub.f32 %v305, %v659
        %v661 = vand.u32 %v660, 4294901760
        %v662 = vsub.f32 %v660, %v661
        %v663 = vand.u32 %v662, 4294901760
        %664 = vmatpush2.msra.mxu0 %v663
        %665 = vmatprep.subr.mxu0 0.0
        %v666 = vand.u32 %v304, 4294901760
        %v667 = vsub.f32 %v304, %v666
        %v668 = vand.u32 %v667, 4294901760
        %v669 = vsub.f32 %v667, %v668
        %v670 = vand.u32 %v669, 4294901760
        %671 = vmatpush2.msra.mxu0 %v670
        %672 = vmatprep.subr.mxu0 0.0
        %v673 = vand.u32 %v303, 4294901760
        %v674 = vsub.f32 %v303, %v673
        %v675 = vand.u32 %v674, 4294901760
        %v676 = vsub.f32 %v674, %v675
        %v677 = vand.u32 %v676, 4294901760
        %678 = vmatpush2.msra.mxu0 %v677
        %679 = vmatprep.subr.mxu0 0.0
        %v680 = vand.u32 %v302, 4294901760
        %v681 = vsub.f32 %v302, %v680
        %v682 = vand.u32 %v681, 4294901760
        %v683 = vsub.f32 %v681, %v682
        %v684 = vand.u32 %v683, 4294901760
        %685 = vmatpush2.msra.mxu0 %v684
        %686 = vmatprep.subr.mxu0 0.0
        %v687 = vand.u32 %v301, 4294901760
        %v688 = vsub.f32 %v301, %v687
        %v689 = vand.u32 %v688, 4294901760
        %v690 = vsub.f32 %v688, %v689
        %v691 = vand.u32 %v690, 4294901760
        %692 = vmatpush2.msra.mxu0 %v691
        %693 = vmatprep.subr.mxu0 0.0
        %v694 = vand.u32 %v300, 4294901760
        %v695 = vsub.f32 %v300, %v694
        %v696 = vand.u32 %v695, 4294901760
        %v697 = vsub.f32 %v695, %v696
        %v698 = vand.u32 %v697, 4294901760
        %699 = vmatpush2.msra.mxu0 %v698
        %700 = vmatprep.subr.mxu0 0.0
        %v701 = vand.u32 %v299, 4294901760
        %v702 = vsub.f32 %v299, %v701
        %v703 = vand.u32 %v702, 4294901760
        %v704 = vsub.f32 %v702, %v703
        %v705 = vand.u32 %v704, 4294901760
        %706 = vmatpush2.msra.mxu0 %v705
        %707 = vmatprep.subr.mxu0 0.0
        %v708 = vand.u32 %v298, 4294901760
        %v709 = vsub.f32 %v298, %v708
        %v710 = vand.u32 %v709, 4294901760
        %v711 = vsub.f32 %v709, %v710
        %v712 = vand.u32 %v711, 4294901760
        %713 = vmatpush2.msra.mxu0 %v712
        %714 = vmatprep.subr.mxu0 0.0
        %v715 = vand.u32 %v297, 4294901760
        %v716 = vsub.f32 %v297, %v715
        %v717 = vand.u32 %v716, 4294901760
        %v718 = vsub.f32 %v716, %v717
        %v719 = vand.u32 %v718, 4294901760
        %720 = vmatpush2.msra.mxu0 %v719
        %721 = vmatprep.subr.mxu0 0.0
        %v722 = vand.u32 %v296, 4294901760
        %v723 = vsub.f32 %v296, %v722
        %v724 = vand.u32 %v723, 4294901760
        %v725 = vsub.f32 %v723, %v724
        %v726 = vand.u32 %v725, 4294901760
        %727 = vmatpush2.msra.mxu0 %v726
        %728 = vmatprep.subr.mxu0 0.0
        %v729 = vand.u32 %v295, 4294901760
        %v730 = vsub.f32 %v295, %v729
        %v731 = vand.u32 %v730, 4294901760
        %v732 = vsub.f32 %v730, %v731
        %v733 = vand.u32 %v732, 4294901760
        %734 = vmatpush2.msra.mxu0 %v733
        %735 = vmatprep.subr.mxu0 0.0
        %v736 = vand.u32 %v294, 4294901760
        %v737 = vsub.f32 %v294, %v736
        %v738 = vand.u32 %v737, 4294901760
        %v739 = vsub.f32 %v737, %v738
        %v740 = vand.u32 %v739, 4294901760
        %741 = vmatpush2.msra.mxu0 %v740
        %742 = vmatprep.subr.mxu0 0.0
        %v743 = vand.u32 %v293, 4294901760
        %v744 = vsub.f32 %v293, %v743
        %v745 = vand.u32 %v744, 4294901760
        %v746 = vsub.f32 %v744, %v745
        %v747 = vand.u32 %v746, 4294901760
        %748 = vmatpush2.msra.mxu0 %v747
        %v749 = vand.u32 %v412, 4294901760
        %750 = vmatprep.mubr.f32.mxu0 %v749
        %v751 = vand.u32 %v411, 4294901760
        %752 = vmatmul.mubr.f32.gmra.mxu0 %v751
        %v753 = vpop.f32.mrf.mxu0
        %v754 = vadd.f32 %v522, %v753
        %v755 = vpop.f32.mrf.mxu0
        %756 = vdwg.mxu0
        %757 = vmatprep.subr.mxu0 0.0
        %v758 = vand.u32 %v292, 4294901760
        %v759 = vsub.f32 %v292, %v758
        %760 = vmatpush1.msra.mxu0 %v759
        %761 = vmatprep.subr.mxu0 0.0
        %v762 = vand.u32 %v291, 4294901760
        %v763 = vsub.f32 %v291, %v762
        %764 = vmatpush1.msra.mxu0 %v763
        %765 = vmatprep.subr.mxu0 0.0
        %v766 = vand.u32 %v290, 4294901760
        %v767 = vsub.f32 %v290, %v766
        %768 = vmatpush1.msra.mxu0 %v767
        %769 = vmatprep.subr.mxu0 0.0
        %v770 = vand.u32 %v289, 4294901760
        %v771 = vsub.f32 %v289, %v770
        %772 = vmatpush1.msra.mxu0 %v771
        %773 = vmatprep.subr.mxu0 0.0
        %v774 = vand.u32 %v288, 4294901760
        %v775 = vsub.f32 %v288, %v774
        %776 = vmatpush1.msra.mxu0 %v775
        %777 = vmatprep.subr.mxu0 0.0
        %v778 = vand.u32 %v287, 4294901760
        %v779 = vsub.f32 %v287, %v778
        %780 = vmatpush1.msra.mxu0 %v779
        %781 = vmatprep.subr.mxu0 0.0
        %v782 = vand.u32 %v286, 4294901760
        %v783 = vsub.f32 %v286, %v782
        %784 = vmatpush1.msra.mxu0 %v783
        %785 = vmatprep.subr.mxu0 0.0
        %v786 = vand.u32 %v285, 4294901760
        %v787 = vsub.f32 %v285, %v786
        %788 = vmatpush1.msra.mxu0 %v787
        %789 = vmatprep.subr.mxu0 0.0
        %v790 = vand.u32 %v284, 4294901760
        %v791 = vsub.f32 %v284, %v790
        %792 = vmatpush1.msra.mxu0 %v791
        %793 = vmatprep.subr.mxu0 0.0
        %v794 = vand.u32 %v283, 4294901760
        %v795 = vsub.f32 %v283, %v794
        %796 = vmatpush1.msra.mxu0 %v795
        %797 = vmatprep.subr.mxu0 0.0
        %v798 = vand.u32 %v282, 4294901760
        %v799 = vsub.f32 %v282, %v798
        %800 = vmatpush1.msra.mxu0 %v799
        %801 = vmatprep.subr.mxu0 0.0
        %v802 = vand.u32 %v281, 4294901760
        %v803 = vsub.f32 %v281, %v802
        %804 = vmatpush1.msra.mxu0 %v803
        %805 = vmatprep.subr.mxu0 0.0
        %v806 = vand.u32 %v280, 4294901760
        %v807 = vsub.f32 %v280, %v806
        %808 = vmatpush1.msra.mxu0 %v807
        %809 = vmatprep.subr.mxu0 0.0
        %v810 = vand.u32 %v279, 4294901760
        %v811 = vsub.f32 %v279, %v810
        %812 = vmatpush1.msra.mxu0 %v811
        %813 = vmatprep.subr.mxu0 0.0
        %v814 = vand.u32 %v278, 4294901760
        %v815 = vsub.f32 %v278, %v814
        %816 = vmatpush1.msra.mxu0 %v815
        %817 = vmatprep.subr.mxu0 0.0
        %v818 = vand.u32 %v277, 4294901760
        %v819 = vsub.f32 %v277, %v818
        %820 = vmatpush1.msra.mxu0 %v819
        %821 = vmatprep.subr.mxu0 0.0
        %v822 = vand.u32 %v308, 4294901760
        %v823 = vsub.f32 %v308, %v822
        %824 = vmatpush2.msra.mxu0 %v823
        %825 = vmatprep.subr.mxu0 0.0
        %v826 = vand.u32 %v307, 4294901760
        %v827 = vsub.f32 %v307, %v826
        %828 = vmatpush2.msra.mxu0 %v827
        %829 = vmatprep.subr.mxu0 0.0
        %v830 = vand.u32 %v306, 4294901760
        %v831 = vsub.f32 %v306, %v830
        %832 = vmatpush2.msra.mxu0 %v831
        %833 = vmatprep.subr.mxu0 0.0
        %v834 = vand.u32 %v305, 4294901760
        %v835 = vsub.f32 %v305, %v834
        %836 = vmatpush2.msra.mxu0 %v835
        %837 = vmatprep.subr.mxu0 0.0
        %v838 = vand.u32 %v304, 4294901760
        %v839 = vsub.f32 %v304, %v838
        %840 = vmatpush2.msra.mxu0 %v839
        %841 = vmatprep.subr.mxu0 0.0
        %v842 = vand.u32 %v303, 4294901760
        %v843 = vsub.f32 %v303, %v842
        %844 = vmatpush2.msra.mxu0 %v843
        %845 = vmatprep.subr.mxu0 0.0
        %v846 = vand.u32 %v302, 4294901760
        %v847 = vsub.f32 %v302, %v846
        %848 = vmatpush2.msra.mxu0 %v847
        %849 = vmatprep.subr.mxu0 0.0
        %v850 = vand.u32 %v301, 4294901760
        %v851 = vsub.f32 %v301, %v850
        %852 = vmatpush2.msra.mxu0 %v851
        %853 = vmatprep.subr.mxu0 0.0
        %v854 = vand.u32 %v300, 4294901760
        %v855 = vsub.f32 %v300, %v854
        %856 = vmatpush2.msra.mxu0 %v855
        %857 = vmatprep.subr.mxu0 0.0
        %v858 = vand.u32 %v299, 4294901760
        %v859 = vsub.f32 %v299, %v858
        %860 = vmatpush2.msra.mxu0 %v859
        %861 = vmatprep.subr.mxu0 0.0
        %v862 = vand.u32 %v298, 4294901760
        %v863 = vsub.f32 %v298, %v862
        %864 = vmatpush2.msra.mxu0 %v863
        %865 = vmatprep.subr.mxu0 0.0
        %v866 = vand.u32 %v297, 4294901760
        %v867 = vsub.f32 %v297, %v866
        %868 = vmatpush2.msra.mxu0 %v867
        %869 = vmatprep.subr.mxu0 0.0
        %v870 = vand.u32 %v296, 4294901760
        %v871 = vsub.f32 %v296, %v870
        %872 = vmatpush2.msra.mxu0 %v871
        %873 = vmatprep.subr.mxu0 0.0
        %v874 = vand.u32 %v295, 4294901760
        %v875 = vsub.f32 %v295, %v874
        %876 = vmatpush2.msra.mxu0 %v875
        %877 = vmatprep.subr.mxu0 0.0
        %v878 = vand.u32 %v294, 4294901760
        %v879 = vsub.f32 %v294, %v878
        %880 = vmatpush2.msra.mxu0 %v879
        %881 = vmatprep.subr.mxu0 0.0
        %v882 = vand.u32 %v293, 4294901760
        %v883 = vsub.f32 %v293, %v882
        %884 = vmatpush2.msra.mxu0 %v883
        %v885 = vand.u32 %v412, 4294901760
        %v886 = vsub.f32 %v412, %v885
        %887 = vmatprep.mubr.f32.mxu0 %v886
        %v888 = vand.u32 %v411, 4294901760
        %v889 = vsub.f32 %v411, %v888
        %890 = vmatmul.mubr.f32.gmra.mxu0 %v889
        %v891 = vpop.f32.mrf.mxu0
        %v892 = vadd.f32 %v754, %v891
        %v893 = vpop.f32.mrf.mxu0
        %894 = vdwg.mxu0
        %895 = vmatprep.subr.mxu0 0.0
        %v896 = vand.u32 %v292, 4294901760
        %897 = vmatpush1.msra.mxu0 %v896
        %898 = vmatprep.subr.mxu0 0.0
        %v899 = vand.u32 %v291, 4294901760
        %900 = vmatpush1.msra.mxu0 %v899
        %901 = vmatprep.subr.mxu0 0.0
        %v902 = vand.u32 %v290, 4294901760
        %903 = vmatpush1.msra.mxu0 %v902
        %904 = vmatprep.subr.mxu0 0.0
        %v905 = vand.u32 %v289, 4294901760
        %906 = vmatpush1.msra.mxu0 %v905
        %907 = vmatprep.subr.mxu0 0.0
        %v908 = vand.u32 %v288, 4294901760
        %909 = vmatpush1.msra.mxu0 %v908
        %910 = vmatprep.subr.mxu0 0.0
        %v911 = vand.u32 %v287, 4294901760
        %912 = vmatpush1.msra.mxu0 %v911
        %913 = vmatprep.subr.mxu0 0.0
        %v914 = vand.u32 %v286, 4294901760
        %915 = vmatpush1.msra.mxu0 %v914
        %916 = vmatprep.subr.mxu0 0.0
        %v917 = vand.u32 %v285, 4294901760
        %918 = vmatpush1.msra.mxu0 %v917
        %919 = vmatprep.subr.mxu0 0.0
        %v920 = vand.u32 %v284, 4294901760
        %921 = vmatpush1.msra.mxu0 %v920
        %922 = vmatprep.subr.mxu0 0.0
        %v923 = vand.u32 %v283, 4294901760
        %924 = vmatpush1.msra.mxu0 %v923
        %925 = vmatprep.subr.mxu0 0.0
        %v926 = vand.u32 %v282, 4294901760
        %927 = vmatpush1.msra.mxu0 %v926
        %928 = vmatprep.subr.mxu0 0.0
        %v929 = vand.u32 %v281, 4294901760
        %930 = vmatpush1.msra.mxu0 %v929
        %931 = vmatprep.subr.mxu0 0.0
        %v932 = vand.u32 %v280, 4294901760
        %933 = vmatpush1.msra.mxu0 %v932
        %934 = vmatprep.subr.mxu0 0.0
        %v935 = vand.u32 %v279, 4294901760
        %936 = vmatpush1.msra.mxu0 %v935
        %937 = vmatprep.subr.mxu0 0.0
        %v938 = vand.u32 %v278, 4294901760
        %939 = vmatpush1.msra.mxu0 %v938
        %940 = vmatprep.subr.mxu0 0.0
        %v941 = vand.u32 %v277, 4294901760
        %942 = vmatpush1.msra.mxu0 %v941
        %943 = vmatprep.subr.mxu0 0.0
        %v944 = vand.u32 %v308, 4294901760
        %945 = vmatpush2.msra.mxu0 %v944
        %946 = vmatprep.subr.mxu0 0.0
        %v947 = vand.u32 %v307, 4294901760
        %948 = vmatpush2.msra.mxu0 %v947
        %949 = vmatprep.subr.mxu0 0.0
        %v950 = vand.u32 %v306, 4294901760
        %951 = vmatpush2.msra.mxu0 %v950
        %952 = vmatprep.subr.mxu0 0.0
        %v953 = vand.u32 %v305, 4294901760
        %954 = vmatpush2.msra.mxu0 %v953
        %955 = vmatprep.subr.mxu0 0.0
        %v956 = vand.u32 %v304, 4294901760
        %957 = vmatpush2.msra.mxu0 %v956
        %958 = vmatprep.subr.mxu0 0.0
        %v959 = vand.u32 %v303, 4294901760
        %960 = vmatpush2.msra.mxu0 %v959
        %961 = vmatprep.subr.mxu0 0.0
        %v962 = vand.u32 %v302, 4294901760
        %963 = vmatpush2.msra.mxu0 %v962
        %964 = vmatprep.subr.mxu0 0.0
        %v965 = vand.u32 %v301, 4294901760
        %966 = vmatpush2.msra.mxu0 %v965
        %967 = vmatprep.subr.mxu0 0.0
        %v968 = vand.u32 %v300, 4294901760
        %969 = vmatpush2.msra.mxu0 %v968
        %970 = vmatprep.subr.mxu0 0.0
        %v971 = vand.u32 %v299, 4294901760
        %972 = vmatpush2.msra.mxu0 %v971
        %973 = vmatprep.subr.mxu0 0.0
        %v974 = vand.u32 %v298, 4294901760
        %975 = vmatpush2.msra.mxu0 %v974
        %976 = vmatprep.subr.mxu0 0.0
        %v977 = vand.u32 %v297, 4294901760
        %978 = vmatpush2.msra.mxu0 %v977
        %979 = vmatprep.subr.mxu0 0.0
        %v980 = vand.u32 %v296, 4294901760
        %981 = vmatpush2.msra.mxu0 %v980
        %982 = vmatprep.subr.mxu0 0.0
        %v983 = vand.u32 %v295, 4294901760
        %984 = vmatpush2.msra.mxu0 %v983
        %985 = vmatprep.subr.mxu0 0.0
        %v986 = vand.u32 %v294, 4294901760
        %987 = vmatpush2.msra.mxu0 %v986
        %988 = vmatprep.subr.mxu0 0.0
        %v989 = vand.u32 %v293, 4294901760
        %990 = vmatpush2.msra.mxu0 %v989
        %v991 = vand.u32 %v412, 4294901760
        %v992 = vsub.f32 %v412, %v991
        %v993 = vand.u32 %v992, 4294901760
        %994 = vmatprep.mubr.f32.mxu0 %v993
        %v995 = vand.u32 %v411, 4294901760
        %v996 = vsub.f32 %v411, %v995
        %v997 = vand.u32 %v996, 4294901760
        %998 = vmatmul.mubr.f32.gmra.mxu0 %v997
        %v999 = vpop.f32.mrf.mxu0
        %v1000 = vadd.f32 %v892, %v999
        %v1001 = vpop.f32.mrf.mxu0
        %1002 = vdwg.mxu0
        %1003 = vmatprep.subr.mxu0 0.0
        %v1004 = vand.u32 %v292, 4294901760
        %v1005 = vsub.f32 %v292, %v1004
        %v1006 = vand.u32 %v1005, 4294901760
        %1007 = vmatpush1.msra.mxu0 %v1006
        %1008 = vmatprep.subr.mxu0 0.0
        %v1009 = vand.u32 %v291, 4294901760
        %v1010 = vsub.f32 %v291, %v1009
        %v1011 = vand.u32 %v1010, 4294901760
        %1012 = vmatpush1.msra.mxu0 %v1011
        %1013 = vmatprep.subr.mxu0 0.0
        %v1014 = vand.u32 %v290, 4294901760
        %v1015 = vsub.f32 %v290, %v1014
        %v1016 = vand.u32 %v1015, 4294901760
        %1017 = vmatpush1.msra.mxu0 %v1016
        %1018 = vmatprep.subr.mxu0 0.0
        %v1019 = vand.u32 %v289, 4294901760
        %v1020 = vsub.f32 %v289, %v1019
        %v1021 = vand.u32 %v1020, 4294901760
        %1022 = vmatpush1.msra.mxu0 %v1021
        %1023 = vmatprep.subr.mxu0 0.0
        %v1024 = vand.u32 %v288, 4294901760
        %v1025 = vsub.f32 %v288, %v1024
        %v1026 = vand.u32 %v1025, 4294901760
        %1027 = vmatpush1.msra.mxu0 %v1026
        %1028 = vmatprep.subr.mxu0 0.0
        %v1029 = vand.u32 %v287, 4294901760
        %v1030 = vsub.f32 %v287, %v1029
        %v1031 = vand.u32 %v1030, 4294901760
        %1032 = vmatpush1.msra.mxu0 %v1031
        %1033 = vmatprep.subr.mxu0 0.0
        %v1034 = vand.u32 %v286, 4294901760
        %v1035 = vsub.f32 %v286, %v1034
        %v1036 = vand.u32 %v1035, 4294901760
        %1037 = vmatpush1.msra.mxu0 %v1036
        %1038 = vmatprep.subr.mxu0 0.0
        %v1039 = vand.u32 %v285, 4294901760
        %v1040 = vsub.f32 %v285, %v1039
        %v1041 = vand.u32 %v1040, 4294901760
        %1042 = vmatpush1.msra.mxu0 %v1041
        %1043 = vmatprep.subr.mxu0 0.0
        %v1044 = vand.u32 %v284, 4294901760
        %v1045 = vsub.f32 %v284, %v1044
        %v1046 = vand.u32 %v1045, 4294901760
        %1047 = vmatpush1.msra.mxu0 %v1046
        %1048 = vmatprep.subr.mxu0 0.0
        %v1049 = vand.u32 %v283, 4294901760
        %v1050 = vsub.f32 %v283, %v1049
        %v1051 = vand.u32 %v1050, 4294901760
        %1052 = vmatpush1.msra.mxu0 %v1051
        %1053 = vmatprep.subr.mxu0 0.0
        %v1054 = vand.u32 %v282, 4294901760
        %v1055 = vsub.f32 %v282, %v1054
        %v1056 = vand.u32 %v1055, 4294901760
        %1057 = vmatpush1.msra.mxu0 %v1056
        %1058 = vmatprep.subr.mxu0 0.0
        %v1059 = vand.u32 %v281, 4294901760
        %v1060 = vsub.f32 %v281, %v1059
        %v1061 = vand.u32 %v1060, 4294901760
        %1062 = vmatpush1.msra.mxu0 %v1061
        %1063 = vmatprep.subr.mxu0 0.0
        %v1064 = vand.u32 %v280, 4294901760
        %v1065 = vsub.f32 %v280, %v1064
        %v1066 = vand.u32 %v1065, 4294901760
        %1067 = vmatpush1.msra.mxu0 %v1066
        %1068 = vmatprep.subr.mxu0 0.0
        %v1069 = vand.u32 %v279, 4294901760
        %v1070 = vsub.f32 %v279, %v1069
        %v1071 = vand.u32 %v1070, 4294901760
        %1072 = vmatpush1.msra.mxu0 %v1071
        %1073 = vmatprep.subr.mxu0 0.0
        %v1074 = vand.u32 %v278, 4294901760
        %v1075 = vsub.f32 %v278, %v1074
        %v1076 = vand.u32 %v1075, 4294901760
        %1077 = vmatpush1.msra.mxu0 %v1076
        %1078 = vmatprep.subr.mxu0 0.0
        %v1079 = vand.u32 %v277, 4294901760
        %v1080 = vsub.f32 %v277, %v1079
        %v1081 = vand.u32 %v1080, 4294901760
        %1082 = vmatpush1.msra.mxu0 %v1081
        %1083 = vmatprep.subr.mxu0 0.0
        %v1084 = vand.u32 %v308, 4294901760
        %v1085 = vsub.f32 %v308, %v1084
        %v1086 = vand.u32 %v1085, 4294901760
        %1087 = vmatpush2.msra.mxu0 %v1086
        %1088 = vmatprep.subr.mxu0 0.0
        %v1089 = vand.u32 %v307, 4294901760
        %v1090 = vsub.f32 %v307, %v1089
        %v1091 = vand.u32 %v1090, 4294901760
        %1092 = vmatpush2.msra.mxu0 %v1091
        %1093 = vmatprep.subr.mxu0 0.0
        %v1094 = vand.u32 %v306, 4294901760
        %v1095 = vsub.f32 %v306, %v1094
        %v1096 = vand.u32 %v1095, 4294901760
        %1097 = vmatpush2.msra.mxu0 %v1096
        %1098 = vmatprep.subr.mxu0 0.0
        %v1099 = vand.u32 %v305, 4294901760
        %v1100 = vsub.f32 %v305, %v1099
        %v1101 = vand.u32 %v1100, 4294901760
        %1102 = vmatpush2.msra.mxu0 %v1101
        %1103 = vmatprep.subr.mxu0 0.0
        %v1104 = vand.u32 %v304, 4294901760
        %v1105 = vsub.f32 %v304, %v1104
        %v1106 = vand.u32 %v1105, 4294901760
        %1107 = vmatpush2.msra.mxu0 %v1106
        %1108 = vmatprep.subr.mxu0 0.0
        %v1109 = vand.u32 %v303, 4294901760
        %v1110 = vsub.f32 %v303, %v1109
        %v1111 = vand.u32 %v1110, 4294901760
        %1112 = vmatpush2.msra.mxu0 %v1111
        %1113 = vmatprep.subr.mxu0 0.0
        %v1114 = vand.u32 %v302, 4294901760
        %v1115 = vsub.f32 %v302, %v1114
        %v1116 = vand.u32 %v1115, 4294901760
        %1117 = vmatpush2.msra.mxu0 %v1116
        %1118 = vmatprep.subr.mxu0 0.0
        %v1119 = vand.u32 %v301, 4294901760
        %v1120 = vsub.f32 %v301, %v1119
        %v1121 = vand.u32 %v1120, 4294901760
        %1122 = vmatpush2.msra.mxu0 %v1121
        %1123 = vmatprep.subr.mxu0 0.0
        %v1124 = vand.u32 %v300, 4294901760
        %v1125 = vsub.f32 %v300, %v1124
        %v1126 = vand.u32 %v1125, 4294901760
        %1127 = vmatpush2.msra.mxu0 %v1126
        %1128 = vmatprep.subr.mxu0 0.0
        %v1129 = vand.u32 %v299, 4294901760
        %v1130 = vsub.f32 %v299, %v1129
        %v1131 = vand.u32 %v1130, 4294901760
        %1132 = vmatpush2.msra.mxu0 %v1131
        %1133 = vmatprep.subr.mxu0 0.0
        %v1134 = vand.u32 %v298, 4294901760
        %v1135 = vsub.f32 %v298, %v1134
        %v1136 = vand.u32 %v1135, 4294901760
        %1137 = vmatpush2.msra.mxu0 %v1136
        %1138 = vmatprep.subr.mxu0 0.0
        %v1139 = vand.u32 %v297, 4294901760
        %v1140 = vsub.f32 %v297, %v1139
        %v1141 = vand.u32 %v1140, 4294901760
        %1142 = vmatpush2.msra.mxu0 %v1141
        %1143 = vmatprep.subr.mxu0 0.0
        %v1144 = vand.u32 %v296, 4294901760
        %v1145 = vsub.f32 %v296, %v1144
        %v1146 = vand.u32 %v1145, 4294901760
        %1147 = vmatpush2.msra.mxu0 %v1146
        %1148 = vmatprep.subr.mxu0 0.0
        %v1149 = vand.u32 %v295, 4294901760
        %v1150 = vsub.f32 %v295, %v1149
        %v1151 = vand.u32 %v1150, 4294901760
        %1152 = vmatpush2.msra.mxu0 %v1151
        %1153 = vmatprep.subr.mxu0 0.0
        %v1154 = vand.u32 %v294, 4294901760
        %v1155 = vsub.f32 %v294, %v1154
        %v1156 = vand.u32 %v1155, 4294901760
        %1157 = vmatpush2.msra.mxu0 %v1156
        %1158 = vmatprep.subr.mxu0 0.0
        %v1159 = vand.u32 %v293, 4294901760
        %v1160 = vsub.f32 %v293, %v1159
        %v1161 = vand.u32 %v1160, 4294901760
        %1162 = vmatpush2.msra.mxu0 %v1161
        %v1163 = vand.u32 %v412, 4294901760
        %1164 = vmatprep.mubr.f32.mxu0 %v1163
        %v1165 = vand.u32 %v411, 4294901760
        %1166 = vmatmul.mubr.f32.gmra.mxu0 %v1165
        %v1167 = vpop.f32.mrf.mxu0
        %v1168 = vadd.f32 %v1000, %v1167
        %v1169 = vpop.f32.mrf.mxu0
        %1170 = vdwg.mxu0
        %1171 = vmatprep.subr.mxu0 0.0
        %v1172 = vand.u32 %v292, 4294901760
        %1173 = vmatpush1.msra.mxu0 %v1172
        %1174 = vmatprep.subr.mxu0 0.0
        %v1175 = vand.u32 %v291, 4294901760
        %1176 = vmatpush1.msra.mxu0 %v1175
        %1177 = vmatprep.subr.mxu0 0.0
        %v1178 = vand.u32 %v290, 4294901760
        %1179 = vmatpush1.msra.mxu0 %v1178
        %1180 = vmatprep.subr.mxu0 0.0
        %v1181 = vand.u32 %v289, 4294901760
        %1182 = vmatpush1.msra.mxu0 %v1181
        %1183 = vmatprep.subr.mxu0 0.0
        %v1184 = vand.u32 %v288, 4294901760
        %1185 = vmatpush1.msra.mxu0 %v1184
        %1186 = vmatprep.subr.mxu0 0.0
        %v1187 = vand.u32 %v287, 4294901760
        %1188 = vmatpush1.msra.mxu0 %v1187
        %1189 = vmatprep.subr.mxu0 0.0
        %v1190 = vand.u32 %v286, 4294901760
        %1191 = vmatpush1.msra.mxu0 %v1190
        %1192 = vmatprep.subr.mxu0 0.0
        %v1193 = vand.u32 %v285, 4294901760
        %1194 = vmatpush1.msra.mxu0 %v1193
        %1195 = vmatprep.subr.mxu0 0.0
        %v1196 = vand.u32 %v284, 4294901760
        %1197 = vmatpush1.msra.mxu0 %v1196
        %1198 = vmatprep.subr.mxu0 0.0
        %v1199 = vand.u32 %v283, 4294901760
        %1200 = vmatpush1.msra.mxu0 %v1199
        %1201 = vmatprep.subr.mxu0 0.0
        %v1202 = vand.u32 %v282, 4294901760
        %1203 = vmatpush1.msra.mxu0 %v1202
        %1204 = vmatprep.subr.mxu0 0.0
        %v1205 = vand.u32 %v281, 4294901760
        %1206 = vmatpush1.msra.mxu0 %v1205
        %1207 = vmatprep.subr.mxu0 0.0
        %v1208 = vand.u32 %v280, 4294901760
        %1209 = vmatpush1.msra.mxu0 %v1208
        %1210 = vmatprep.subr.mxu0 0.0
        %v1211 = vand.u32 %v279, 4294901760
        %1212 = vmatpush1.msra.mxu0 %v1211
        %1213 = vmatprep.subr.mxu0 0.0
        %v1214 = vand.u32 %v278, 4294901760
        %1215 = vmatpush1.msra.mxu0 %v1214
        %1216 = vmatprep.subr.mxu0 0.0
        %v1217 = vand.u32 %v277, 4294901760
        %1218 = vmatpush1.msra.mxu0 %v1217
        %1219 = vmatprep.subr.mxu0 0.0
        %v1220 = vand.u32 %v308, 4294901760
        %1221 = vmatpush2.msra.mxu0 %v1220
        %1222 = vmatprep.subr.mxu0 0.0
        %v1223 = vand.u32 %v307, 4294901760
        %1224 = vmatpush2.msra.mxu0 %v1223
        %1225 = vmatprep.subr.mxu0 0.0
        %v1226 = vand.u32 %v306, 4294901760
        %1227 = vmatpush2.msra.mxu0 %v1226
        %1228 = vmatprep.subr.mxu0 0.0
        %v1229 = vand.u32 %v305, 4294901760
        %1230 = vmatpush2.msra.mxu0 %v1229
        %1231 = vmatprep.subr.mxu0 0.0
        %v1232 = vand.u32 %v304, 4294901760
        %1233 = vmatpush2.msra.mxu0 %v1232
        %1234 = vmatprep.subr.mxu0 0.0
        %v1235 = vand.u32 %v303, 4294901760
        %1236 = vmatpush2.msra.mxu0 %v1235
        %1237 = vmatprep.subr.mxu0 0.0
        %v1238 = vand.u32 %v302, 4294901760
        %1239 = vmatpush2.msra.mxu0 %v1238
        %1240 = vmatprep.subr.mxu0 0.0
        %v1241 = vand.u32 %v301, 4294901760
        %1242 = vmatpush2.msra.mxu0 %v1241
        %1243 = vmatprep.subr.mxu0 0.0
        %v1244 = vand.u32 %v300, 4294901760
        %1245 = vmatpush2.msra.mxu0 %v1244
        %1246 = vmatprep.subr.mxu0 0.0
        %v1247 = vand.u32 %v299, 4294901760
        %1248 = vmatpush2.msra.mxu0 %v1247
        %1249 = vmatprep.subr.mxu0 0.0
        %v1250 = vand.u32 %v298, 4294901760
        %1251 = vmatpush2.msra.mxu0 %v1250
        %1252 = vmatprep.subr.mxu0 0.0
        %v1253 = vand.u32 %v297, 4294901760
        %1254 = vmatpush2.msra.mxu0 %v1253
        %1255 = vmatprep.subr.mxu0 0.0
        %v1256 = vand.u32 %v296, 4294901760
        %1257 = vmatpush2.msra.mxu0 %v1256
        %1258 = vmatprep.subr.mxu0 0.0
        %v1259 = vand.u32 %v295, 4294901760
        %1260 = vmatpush2.msra.mxu0 %v1259
        %1261 = vmatprep.subr.mxu0 0.0
        %v1262 = vand.u32 %v294, 4294901760
        %1263 = vmatpush2.msra.mxu0 %v1262
        %1264 = vmatprep.subr.mxu0 0.0
        %v1265 = vand.u32 %v293, 4294901760
        %1266 = vmatpush2.msra.mxu0 %v1265
        %v1267 = vand.u32 %v412, 4294901760
        %1268 = vmatprep.mubr.f32.mxu0 %v1267
        %v1269 = vand.u32 %v411, 4294901760
        %1270 = vmatmul.mubr.f32.gmra.mxu0 %v1269
        %v1271 = vpop.f32.mrf.mxu0
        %v1272 = vadd.f32 %v1168, %v1271
        %v1273 = vpop.f32.mrf.mxu0
        %1274 = vdwg.mxu0
        %1275 = vst [vmem:[%s275] sm:$0x3f] %v1272
        %v1276 = vld [vmem:[#allocation7] sm:$0xff]
        %v1277 = vld [vmem:[#allocation7 + $0x8] sm:$0xff]
        %v1278 = vld [vmem:[#allocation7 + $0x10] sm:$0xff]
        %v1279 = vld [vmem:[#allocation7 + $0x18] sm:$0xff]
        %v1280 = vld [vmem:[#allocation7 + $0x20] sm:$0xff]
        %v1281 = vld [vmem:[#allocation7 + $0x28] sm:$0xff]
        %v1282 = vld [vmem:[#allocation7 + $0x30] sm:$0xff]
        %v1283 = vld [vmem:[#allocation7 + $0x38] sm:$0xff]
        %v1284 = vld [vmem:[%s231] sm:$0x1]
        %v1285 = vld [vmem:[%s231 + $0x8] sm:$0x1]
        %v1286 = vld [vmem:[%s231 + $0x10] sm:$0x1]
        %v1287 = vld [vmem:[%s231 + $0x18] sm:$0x1]
        %v1288 = vld [vmem:[%s231 + $0x20] sm:$0x1]
        %v1289 = vld [vmem:[%s231 + $0x28] sm:$0x1]
        %v1296 = vrot.slane %v1285, 7
        %v1297 = vsel %vm340, %v1296, %v1284
        %v1298 = vrot.slane %v1286, 6
        %v1299 = vsel %vm343, %v1298, %v1297
        %v1300 = vrot.slane %v1287, 5
        %v1301 = vsel %vm346, %v1300, %v1299
        %v1302 = vrot.slane %v1288, 4
        %v1303 = vsel %vm349, %v1302, %v1301
        %v1304 = vrot.slane %v1289, 3
        %v1305 = vsel %vm352, %v1304, %v1303
        %v1306 = vsel %vm410, %v1305, 0
        %1308 = vmatprep.subr.mxu0 0.0
        %1309 = vmatpush1.msra.mxu0 0.0
        %1310 = vmatprep.subr.mxu0 0.0
        %1311 = vmatpush1.msra.mxu0 0.0
        %1312 = vmatprep.subr.mxu0 0.0
        %1313 = vmatpush1.msra.mxu0 0.0
        %1314 = vmatprep.subr.mxu0 0.0
        %1315 = vmatpush1.msra.mxu0 0.0
        %1316 = vmatprep.subr.mxu0 0.0
        %1317 = vmatpush1.msra.mxu0 0.0
        %1318 = vmatprep.subr.mxu0 0.0
        %1319 = vmatpush1.msra.mxu0 0.0
        %1320 = vmatprep.subr.mxu0 0.0
        %1321 = vmatpush1.msra.mxu0 0.0
        %1322 = vmatprep.subr.mxu0 0.0
        %1323 = vmatpush1.msra.mxu0 0.0
        %1324 = vmatprep.subr.mxu0 0.0
        %v1325 = vand.u32 %v1283, 4294901760
        %1326 = vmatpush1.msra.mxu0 %v1325
        %1327 = vmatprep.subr.mxu0 0.0
        %v1328 = vand.u32 %v1282, 4294901760
        %1329 = vmatpush1.msra.mxu0 %v1328
        %1330 = vmatprep.subr.mxu0 0.0
        %v1331 = vand.u32 %v1281, 4294901760
        %1332 = vmatpush1.msra.mxu0 %v1331
        %1333 = vmatprep.subr.mxu0 0.0
        %v1334 = vand.u32 %v1280, 4294901760
        %1335 = vmatpush1.msra.mxu0 %v1334
        %1336 = vmatprep.subr.mxu0 0.0
        %v1337 = vand.u32 %v1279, 4294901760
        %1338 = vmatpush1.msra.mxu0 %v1337
        %1339 = vmatprep.subr.mxu0 0.0
        %v1340 = vand.u32 %v1278, 4294901760
        %1341 = vmatpush1.msra.mxu0 %v1340
        %1342 = vmatprep.subr.mxu0 0.0
        %v1343 = vand.u32 %v1277, 4294901760
        %1344 = vmatpush1.msra.mxu0 %v1343
        %1345 = vmatprep.subr.mxu0 0.0
        %v1346 = vand.u32 %v1276, 4294901760
        %1347 = vmatpush1.msra.mxu0 %v1346
        %1348 = vmatprep.subr.mxu0 0.0
        %1349 = vmatpush2.msra.mxu0 0.0
        %1350 = vmatprep.subr.mxu0 0.0
        %1351 = vmatpush2.msra.mxu0 0.0
        %1352 = vmatprep.subr.mxu0 0.0
        %1353 = vmatpush2.msra.mxu0 0.0
        %1354 = vmatprep.subr.mxu0 0.0
        %1355 = vmatpush2.msra.mxu0 0.0
        %1356 = vmatprep.subr.mxu0 0.0
        %1357 = vmatpush2.msra.mxu0 0.0
        %1358 = vmatprep.subr.mxu0 0.0
        %1359 = vmatpush2.msra.mxu0 0.0
        %1360 = vmatprep.subr.mxu0 0.0
        %1361 = vmatpush2.msra.mxu0 0.0
        %1362 = vmatprep.subr.mxu0 0.0
        %1363 = vmatpush2.msra.mxu0 0.0
        %1364 = vmatprep.subr.mxu0 0.0
        %1365 = vmatpush2.msra.mxu0 0.0
        %1366 = vmatprep.subr.mxu0 0.0
        %1367 = vmatpush2.msra.mxu0 0.0
        %1368 = vmatprep.subr.mxu0 0.0
        %1369 = vmatpush2.msra.mxu0 0.0
        %1370 = vmatprep.subr.mxu0 0.0
        %1371 = vmatpush2.msra.mxu0 0.0
        %1372 = vmatprep.subr.mxu0 0.0
        %1373 = vmatpush2.msra.mxu0 0.0
        %1374 = vmatprep.subr.mxu0 0.0
        %1375 = vmatpush2.msra.mxu0 0.0
        %1376 = vmatprep.subr.mxu0 0.0
        %1377 = vmatpush2.msra.mxu0 0.0
        %1378 = vmatprep.subr.mxu0 0.0
        %1379 = vmatpush2.msra.mxu0 0.0
        %1380 = vmatprep.mubr.f32.mxu0 0.0
        %v1381 = vand.u32 %v1306, 4294901760
        %v1382 = vsub.f32 %v1306, %v1381
        %v1383 = vand.u32 %v1382, 4294901760
        %v1384 = vsub.f32 %v1382, %v1383
        %v1385 = vand.u32 %v1384, 4294901760
        %1386 = vmatmul.mubr.f32.gmra.mxu0 %v1385
        %v1387 = vpop.f32.mrf.mxu0
        %v1388 = vadd.f32 0.0, %v1387
        %v1389 = vpop.f32.mrf.mxu0
        %1390 = vdwg.mxu0
        %1391 = vmatprep.subr.mxu0 0.0
        %1392 = vmatpush1.msra.mxu0 0.0
        %1393 = vmatprep.subr.mxu0 0.0
        %1394 = vmatpush1.msra.mxu0 0.0
        %1395 = vmatprep.subr.mxu0 0.0
        %1396 = vmatpush1.msra.mxu0 0.0
        %1397 = vmatprep.subr.mxu0 0.0
        %1398 = vmatpush1.msra.mxu0 0.0
        %1399 = vmatprep.subr.mxu0 0.0
        %1400 = vmatpush1.msra.mxu0 0.0
        %1401 = vmatprep.subr.mxu0 0.0
        %1402 = vmatpush1.msra.mxu0 0.0
        %1403 = vmatprep.subr.mxu0 0.0
        %1404 = vmatpush1.msra.mxu0 0.0
        %1405 = vmatprep.subr.mxu0 0.0
        %1406 = vmatpush1.msra.mxu0 0.0
        %1407 = vmatprep.subr.mxu0 0.0
        %v1408 = vand.u32 %v1283, 4294901760
        %v1409 = vsub.f32 %v1283, %v1408
        %v1410 = vand.u32 %v1409, 4294901760
        %v1411 = vsub.f32 %v1409, %v1410
        %v1412 = vand.u32 %v1411, 4294901760
        %1413 = vmatpush1.msra.mxu0 %v1412
        %1414 = vmatprep.subr.mxu0 0.0
        %v1415 = vand.u32 %v1282, 4294901760
        %v1416 = vsub.f32 %v1282, %v1415
        %v1417 = vand.u32 %v1416, 4294901760
        %v1418 = vsub.f32 %v1416, %v1417
        %v1419 = vand.u32 %v1418, 4294901760
        %1420 = vmatpush1.msra.mxu0 %v1419
        %1421 = vmatprep.subr.mxu0 0.0
        %v1422 = vand.u32 %v1281, 4294901760
        %v1423 = vsub.f32 %v1281, %v1422
        %v1424 = vand.u32 %v1423, 4294901760
        %v1425 = vsub.f32 %v1423, %v1424
        %v1426 = vand.u32 %v1425, 4294901760
        %1427 = vmatpush1.msra.mxu0 %v1426
        %1428 = vmatprep.subr.mxu0 0.0
        %v1429 = vand.u32 %v1280, 4294901760
        %v1430 = vsub.f32 %v1280, %v1429
        %v1431 = vand.u32 %v1430, 4294901760
        %v1432 = vsub.f32 %v1430, %v1431
        %v1433 = vand.u32 %v1432, 4294901760
        %1434 = vmatpush1.msra.mxu0 %v1433
        %1435 = vmatprep.subr.mxu0 0.0
        %v1436 = vand.u32 %v1279, 4294901760
        %v1437 = vsub.f32 %v1279, %v1436
        %v1438 = vand.u32 %v1437, 4294901760
        %v1439 = vsub.f32 %v1437, %v1438
        %v1440 = vand.u32 %v1439, 4294901760
        %1441 = vmatpush1.msra.mxu0 %v1440
        %1442 = vmatprep.subr.mxu0 0.0
        %v1443 = vand.u32 %v1278, 4294901760
        %v1444 = vsub.f32 %v1278, %v1443
        %v1445 = vand.u32 %v1444, 4294901760
        %v1446 = vsub.f32 %v1444, %v1445
        %v1447 = vand.u32 %v1446, 4294901760
        %1448 = vmatpush1.msra.mxu0 %v1447
        %1449 = vmatprep.subr.mxu0 0.0
        %v1450 = vand.u32 %v1277, 4294901760
        %v1451 = vsub.f32 %v1277, %v1450
        %v1452 = vand.u32 %v1451, 4294901760
        %v1453 = vsub.f32 %v1451, %v1452
        %v1454 = vand.u32 %v1453, 4294901760
        %1455 = vmatpush1.msra.mxu0 %v1454
        %1456 = vmatprep.subr.mxu0 0.0
        %v1457 = vand.u32 %v1276, 4294901760
        %v1458 = vsub.f32 %v1276, %v1457
        %v1459 = vand.u32 %v1458, 4294901760
        %v1460 = vsub.f32 %v1458, %v1459
        %v1461 = vand.u32 %v1460, 4294901760
        %1462 = vmatpush1.msra.mxu0 %v1461
        %1463 = vmatprep.subr.mxu0 0.0
        %1464 = vmatpush2.msra.mxu0 0.0
        %1465 = vmatprep.subr.mxu0 0.0
        %1466 = vmatpush2.msra.mxu0 0.0
        %1467 = vmatprep.subr.mxu0 0.0
        %1468 = vmatpush2.msra.mxu0 0.0
        %1469 = vmatprep.subr.mxu0 0.0
        %1470 = vmatpush2.msra.mxu0 0.0
        %1471 = vmatprep.subr.mxu0 0.0
        %1472 = vmatpush2.msra.mxu0 0.0
        %1473 = vmatprep.subr.mxu0 0.0
        %1474 = vmatpush2.msra.mxu0 0.0
        %1475 = vmatprep.subr.mxu0 0.0
        %1476 = vmatpush2.msra.mxu0 0.0
        %1477 = vmatprep.subr.mxu0 0.0
        %1478 = vmatpush2.msra.mxu0 0.0
        %1479 = vmatprep.subr.mxu0 0.0
        %1480 = vmatpush2.msra.mxu0 0.0
        %1481 = vmatprep.subr.mxu0 0.0
        %1482 = vmatpush2.msra.mxu0 0.0
        %1483 = vmatprep.subr.mxu0 0.0
        %1484 = vmatpush2.msra.mxu0 0.0
        %1485 = vmatprep.subr.mxu0 0.0
        %1486 = vmatpush2.msra.mxu0 0.0
        %1487 = vmatprep.subr.mxu0 0.0
        %1488 = vmatpush2.msra.mxu0 0.0
        %1489 = vmatprep.subr.mxu0 0.0
        %1490 = vmatpush2.msra.mxu0 0.0
        %1491 = vmatprep.subr.mxu0 0.0
        %1492 = vmatpush2.msra.mxu0 0.0
        %1493 = vmatprep.subr.mxu0 0.0
        %1494 = vmatpush2.msra.mxu0 0.0
        %1495 = vmatprep.mubr.f32.mxu0 0.0
        %v1496 = vand.u32 %v1306, 4294901760
        %1497 = vmatmul.mubr.f32.gmra.mxu0 %v1496
        %v1498 = vpop.f32.mrf.mxu0
        %v1499 = vadd.f32 %v1388, %v1498
        %v1500 = vpop.f32.mrf.mxu0
        %1501 = vdwg.mxu0
        %1502 = vmatprep.subr.mxu0 0.0
        %1503 = vmatpush1.msra.mxu0 0.0
        %1504 = vmatprep.subr.mxu0 0.0
        %1505 = vmatpush1.msra.mxu0 0.0
        %1506 = vmatprep.subr.mxu0 0.0
        %1507 = vmatpush1.msra.mxu0 0.0
        %1508 = vmatprep.subr.mxu0 0.0
        %1509 = vmatpush1.msra.mxu0 0.0
        %1510 = vmatprep.subr.mxu0 0.0
        %1511 = vmatpush1.msra.mxu0 0.0
        %1512 = vmatprep.subr.mxu0 0.0
        %1513 = vmatpush1.msra.mxu0 0.0
        %1514 = vmatprep.subr.mxu0 0.0
        %1515 = vmatpush1.msra.mxu0 0.0
        %1516 = vmatprep.subr.mxu0 0.0
        %1517 = vmatpush1.msra.mxu0 0.0
        %1518 = vmatprep.subr.mxu0 0.0
        %v1519 = vand.u32 %v1283, 4294901760
        %v1520 = vsub.f32 %v1283, %v1519
        %1521 = vmatpush1.msra.mxu0 %v1520
        %1522 = vmatprep.subr.mxu0 0.0
        %v1523 = vand.u32 %v1282, 4294901760
        %v1524 = vsub.f32 %v1282, %v1523
        %1525 = vmatpush1.msra.mxu0 %v1524
        %1526 = vmatprep.subr.mxu0 0.0
        %v1527 = vand.u32 %v1281, 4294901760
        %v1528 = vsub.f32 %v1281, %v1527
        %1529 = vmatpush1.msra.mxu0 %v1528
        %1530 = vmatprep.subr.mxu0 0.0
        %v1531 = vand.u32 %v1280, 4294901760
        %v1532 = vsub.f32 %v1280, %v1531
        %1533 = vmatpush1.msra.mxu0 %v1532
        %1534 = vmatprep.subr.mxu0 0.0
        %v1535 = vand.u32 %v1279, 4294901760
        %v1536 = vsub.f32 %v1279, %v1535
        %1537 = vmatpush1.msra.mxu0 %v1536
        %1538 = vmatprep.subr.mxu0 0.0
        %v1539 = vand.u32 %v1278, 4294901760
        %v1540 = vsub.f32 %v1278, %v1539
        %1541 = vmatpush1.msra.mxu0 %v1540
        %1542 = vmatprep.subr.mxu0 0.0
        %v1543 = vand.u32 %v1277, 4294901760
        %v1544 = vsub.f32 %v1277, %v1543
        %1545 = vmatpush1.msra.mxu0 %v1544
        %1546 = vmatprep.subr.mxu0 0.0
        %v1547 = vand.u32 %v1276, 4294901760
        %v1548 = vsub.f32 %v1276, %v1547
        %1549 = vmatpush1.msra.mxu0 %v1548
        %1550 = vmatprep.subr.mxu0 0.0
        %1551 = vmatpush2.msra.mxu0 0.0
        %1552 = vmatprep.subr.mxu0 0.0
        %1553 = vmatpush2.msra.mxu0 0.0
        %1554 = vmatprep.subr.mxu0 0.0
        %1555 = vmatpush2.msra.mxu0 0.0
        %1556 = vmatprep.subr.mxu0 0.0
        %1557 = vmatpush2.msra.mxu0 0.0
        %1558 = vmatprep.subr.mxu0 0.0
        %1559 = vmatpush2.msra.mxu0 0.0
        %1560 = vmatprep.subr.mxu0 0.0
        %1561 = vmatpush2.msra.mxu0 0.0
        %1562 = vmatprep.subr.mxu0 0.0
        %1563 = vmatpush2.msra.mxu0 0.0
        %1564 = vmatprep.subr.mxu0 0.0
        %1565 = vmatpush2.msra.mxu0 0.0
        %1566 = vmatprep.subr.mxu0 0.0
        %1567 = vmatpush2.msra.mxu0 0.0
        %1568 = vmatprep.subr.mxu0 0.0
        %1569 = vmatpush2.msra.mxu0 0.0
        %1570 = vmatprep.subr.mxu0 0.0
        %1571 = vmatpush2.msra.mxu0 0.0
        %1572 = vmatprep.subr.mxu0 0.0
        %1573 = vmatpush2.msra.mxu0 0.0
        %1574 = vmatprep.subr.mxu0 0.0
        %1575 = vmatpush2.msra.mxu0 0.0
        %1576 = vmatprep.subr.mxu0 0.0
        %1577 = vmatpush2.msra.mxu0 0.0
        %1578 = vmatprep.subr.mxu0 0.0
        %1579 = vmatpush2.msra.mxu0 0.0
        %1580 = vmatprep.subr.mxu0 0.0
        %1581 = vmatpush2.msra.mxu0 0.0
        %1582 = vmatprep.mubr.f32.mxu0 0.0
        %v1583 = vand.u32 %v1306, 4294901760
        %v1584 = vsub.f32 %v1306, %v1583
        %1585 = vmatmul.mubr.f32.gmra.mxu0 %v1584
        %v1586 = vpop.f32.mrf.mxu0
        %v1587 = vadd.f32 %v1499, %v1586
        %v1588 = vpop.f32.mrf.mxu0
        %1589 = vdwg.mxu0
        %1590 = vmatprep.subr.mxu0 0.0
        %1591 = vmatpush1.msra.mxu0 0.0
        %1592 = vmatprep.subr.mxu0 0.0
        %1593 = vmatpush1.msra.mxu0 0.0
        %1594 = vmatprep.subr.mxu0 0.0
        %1595 = vmatpush1.msra.mxu0 0.0
        %1596 = vmatprep.subr.mxu0 0.0
        %1597 = vmatpush1.msra.mxu0 0.0
        %1598 = vmatprep.subr.mxu0 0.0
        %1599 = vmatpush1.msra.mxu0 0.0
        %1600 = vmatprep.subr.mxu0 0.0
        %1601 = vmatpush1.msra.mxu0 0.0
        %1602 = vmatprep.subr.mxu0 0.0
        %1603 = vmatpush1.msra.mxu0 0.0
        %1604 = vmatprep.subr.mxu0 0.0
        %1605 = vmatpush1.msra.mxu0 0.0
        %1606 = vmatprep.subr.mxu0 0.0
        %v1607 = vand.u32 %v1283, 4294901760
        %1608 = vmatpush1.msra.mxu0 %v1607
        %1609 = vmatprep.subr.mxu0 0.0
        %v1610 = vand.u32 %v1282, 4294901760
        %1611 = vmatpush1.msra.mxu0 %v1610
        %1612 = vmatprep.subr.mxu0 0.0
        %v1613 = vand.u32 %v1281, 4294901760
        %1614 = vmatpush1.msra.mxu0 %v1613
        %1615 = vmatprep.subr.mxu0 0.0
        %v1616 = vand.u32 %v1280, 4294901760
        %1617 = vmatpush1.msra.mxu0 %v1616
        %1618 = vmatprep.subr.mxu0 0.0
        %v1619 = vand.u32 %v1279, 4294901760
        %1620 = vmatpush1.msra.mxu0 %v1619
        %1621 = vmatprep.subr.mxu0 0.0
        %v1622 = vand.u32 %v1278, 4294901760
        %1623 = vmatpush1.msra.mxu0 %v1622
        %1624 = vmatprep.subr.mxu0 0.0
        %v1625 = vand.u32 %v1277, 4294901760
        %1626 = vmatpush1.msra.mxu0 %v1625
        %1627 = vmatprep.subr.mxu0 0.0
        %v1628 = vand.u32 %v1276, 4294901760
        %1629 = vmatpush1.msra.mxu0 %v1628
        %1630 = vmatprep.subr.mxu0 0.0
        %1631 = vmatpush2.msra.mxu0 0.0
        %1632 = vmatprep.subr.mxu0 0.0
        %1633 = vmatpush2.msra.mxu0 0.0
        %1634 = vmatprep.subr.mxu0 0.0
        %1635 = vmatpush2.msra.mxu0 0.0
        %1636 = vmatprep.subr.mxu0 0.0
        %1637 = vmatpush2.msra.mxu0 0.0
        %1638 = vmatprep.subr.mxu0 0.0
        %1639 = vmatpush2.msra.mxu0 0.0
        %1640 = vmatprep.subr.mxu0 0.0
        %1641 = vmatpush2.msra.mxu0 0.0
        %1642 = vmatprep.subr.mxu0 0.0
        %1643 = vmatpush2.msra.mxu0 0.0
        %1644 = vmatprep.subr.mxu0 0.0
        %1645 = vmatpush2.msra.mxu0 0.0
        %1646 = vmatprep.subr.mxu0 0.0
        %1647 = vmatpush2.msra.mxu0 0.0
        %1648 = vmatprep.subr.mxu0 0.0
        %1649 = vmatpush2.msra.mxu0 0.0
        %1650 = vmatprep.subr.mxu0 0.0
        %1651 = vmatpush2.msra.mxu0 0.0
        %1652 = vmatprep.subr.mxu0 0.0
        %1653 = vmatpush2.msra.mxu0 0.0
        %1654 = vmatprep.subr.mxu0 0.0
        %1655 = vmatpush2.msra.mxu0 0.0
        %1656 = vmatprep.subr.mxu0 0.0
        %1657 = vmatpush2.msra.mxu0 0.0
        %1658 = vmatprep.subr.mxu0 0.0
        %1659 = vmatpush2.msra.mxu0 0.0
        %1660 = vmatprep.subr.mxu0 0.0
        %1661 = vmatpush2.msra.mxu0 0.0
        %1662 = vmatprep.mubr.f32.mxu0 0.0
        %v1663 = vand.u32 %v1306, 4294901760
        %v1664 = vsub.f32 %v1306, %v1663
        %v1665 = vand.u32 %v1664, 4294901760
        %1666 = vmatmul.mubr.f32.gmra.mxu0 %v1665
        %v1667 = vpop.f32.mrf.mxu0
        %v1668 = vadd.f32 %v1587, %v1667
        %v1669 = vpop.f32.mrf.mxu0
        %1670 = vdwg.mxu0
        %1671 = vmatprep.subr.mxu0 0.0
        %1672 = vmatpush1.msra.mxu0 0.0
        %1673 = vmatprep.subr.mxu0 0.0
        %1674 = vmatpush1.msra.mxu0 0.0
        %1675 = vmatprep.subr.mxu0 0.0
        %1676 = vmatpush1.msra.mxu0 0.0
        %1677 = vmatprep.subr.mxu0 0.0
        %1678 = vmatpush1.msra.mxu0 0.0
        %1679 = vmatprep.subr.mxu0 0.0
        %1680 = vmatpush1.msra.mxu0 0.0
        %1681 = vmatprep.subr.mxu0 0.0
        %1682 = vmatpush1.msra.mxu0 0.0
        %1683 = vmatprep.subr.mxu0 0.0
        %1684 = vmatpush1.msra.mxu0 0.0
        %1685 = vmatprep.subr.mxu0 0.0
        %1686 = vmatpush1.msra.mxu0 0.0
        %1687 = vmatprep.subr.mxu0 0.0
        %v1688 = vand.u32 %v1283, 4294901760
        %v1689 = vsub.f32 %v1283, %v1688
        %v1690 = vand.u32 %v1689, 4294901760
        %1691 = vmatpush1.msra.mxu0 %v1690
        %1692 = vmatprep.subr.mxu0 0.0
        %v1693 = vand.u32 %v1282, 4294901760
        %v1694 = vsub.f32 %v1282, %v1693
        %v1695 = vand.u32 %v1694, 4294901760
        %1696 = vmatpush1.msra.mxu0 %v1695
        %1697 = vmatprep.subr.mxu0 0.0
        %v1698 = vand.u32 %v1281, 4294901760
        %v1699 = vsub.f32 %v1281, %v1698
        %v1700 = vand.u32 %v1699, 4294901760
        %1701 = vmatpush1.msra.mxu0 %v1700
        %1702 = vmatprep.subr.mxu0 0.0
        %v1703 = vand.u32 %v1280, 4294901760
        %v1704 = vsub.f32 %v1280, %v1703
        %v1705 = vand.u32 %v1704, 4294901760
        %1706 = vmatpush1.msra.mxu0 %v1705
        %1707 = vmatprep.subr.mxu0 0.0
        %v1708 = vand.u32 %v1279, 4294901760
        %v1709 = vsub.f32 %v1279, %v1708
        %v1710 = vand.u32 %v1709, 4294901760
        %1711 = vmatpush1.msra.mxu0 %v1710
        %1712 = vmatprep.subr.mxu0 0.0
        %v1713 = vand.u32 %v1278, 4294901760
        %v1714 = vsub.f32 %v1278, %v1713
        %v1715 = vand.u32 %v1714, 4294901760
        %1716 = vmatpush1.msra.mxu0 %v1715
        %1717 = vmatprep.subr.mxu0 0.0
        %v1718 = vand.u32 %v1277, 4294901760
        %v1719 = vsub.f32 %v1277, %v1718
        %v1720 = vand.u32 %v1719, 4294901760
        %1721 = vmatpush1.msra.mxu0 %v1720
        %1722 = vmatprep.subr.mxu0 0.0
        %v1723 = vand.u32 %v1276, 4294901760
        %v1724 = vsub.f32 %v1276, %v1723
        %v1725 = vand.u32 %v1724, 4294901760
        %1726 = vmatpush1.msra.mxu0 %v1725
        %1727 = vmatprep.subr.mxu0 0.0
        %1728 = vmatpush2.msra.mxu0 0.0
        %1729 = vmatprep.subr.mxu0 0.0
        %1730 = vmatpush2.msra.mxu0 0.0
        %1731 = vmatprep.subr.mxu0 0.0
        %1732 = vmatpush2.msra.mxu0 0.0
        %1733 = vmatprep.subr.mxu0 0.0
        %1734 = vmatpush2.msra.mxu0 0.0
        %1735 = vmatprep.subr.mxu0 0.0
        %1736 = vmatpush2.msra.mxu0 0.0
        %1737 = vmatprep.subr.mxu0 0.0
        %1738 = vmatpush2.msra.mxu0 0.0
        %1739 = vmatprep.subr.mxu0 0.0
        %1740 = vmatpush2.msra.mxu0 0.0
        %1741 = vmatprep.subr.mxu0 0.0
        %1742 = vmatpush2.msra.mxu0 0.0
        %1743 = vmatprep.subr.mxu0 0.0
        %1744 = vmatpush2.msra.mxu0 0.0
        %1745 = vmatprep.subr.mxu0 0.0
        %1746 = vmatpush2.msra.mxu0 0.0
        %1747 = vmatprep.subr.mxu0 0.0
        %1748 = vmatpush2.msra.mxu0 0.0
        %1749 = vmatprep.subr.mxu0 0.0
        %1750 = vmatpush2.msra.mxu0 0.0
        %1751 = vmatprep.subr.mxu0 0.0
        %1752 = vmatpush2.msra.mxu0 0.0
        %1753 = vmatprep.subr.mxu0 0.0
        %1754 = vmatpush2.msra.mxu0 0.0
        %1755 = vmatprep.subr.mxu0 0.0
        %1756 = vmatpush2.msra.mxu0 0.0
        %1757 = vmatprep.subr.mxu0 0.0
        %1758 = vmatpush2.msra.mxu0 0.0
        %1759 = vmatprep.mubr.f32.mxu0 0.0
        %v1760 = vand.u32 %v1306, 4294901760
        %1761 = vmatmul.mubr.f32.gmra.mxu0 %v1760
        %v1762 = vpop.f32.mrf.mxu0
        %v1763 = vadd.f32 %v1668, %v1762
        %v1764 = vpop.f32.mrf.mxu0
        %1765 = vdwg.mxu0
        %1766 = vmatprep.subr.mxu0 0.0
        %1767 = vmatpush1.msra.mxu0 0.0
        %1768 = vmatprep.subr.mxu0 0.0
        %1769 = vmatpush1.msra.mxu0 0.0
        %1770 = vmatprep.subr.mxu0 0.0
        %1771 = vmatpush1.msra.mxu0 0.0
        %1772 = vmatprep.subr.mxu0 0.0
        %1773 = vmatpush1.msra.mxu0 0.0
        %1774 = vmatprep.subr.mxu0 0.0
        %1775 = vmatpush1.msra.mxu0 0.0
        %1776 = vmatprep.subr.mxu0 0.0
        %1777 = vmatpush1.msra.mxu0 0.0
        %1778 = vmatprep.subr.mxu0 0.0
        %1779 = vmatpush1.msra.mxu0 0.0
        %1780 = vmatprep.subr.mxu0 0.0
        %1781 = vmatpush1.msra.mxu0 0.0
        %1782 = vmatprep.subr.mxu0 0.0
        %v1783 = vand.u32 %v1283, 4294901760
        %1784 = vmatpush1.msra.mxu0 %v1783
        %1785 = vmatprep.subr.mxu0 0.0
        %v1786 = vand.u32 %v1282, 4294901760
        %1787 = vmatpush1.msra.mxu0 %v1786
        %1788 = vmatprep.subr.mxu0 0.0
        %v1789 = vand.u32 %v1281, 4294901760
        %1790 = vmatpush1.msra.mxu0 %v1789
        %1791 = vmatprep.subr.mxu0 0.0
        %v1792 = vand.u32 %v1280, 4294901760
        %1793 = vmatpush1.msra.mxu0 %v1792
        %1794 = vmatprep.subr.mxu0 0.0
        %v1795 = vand.u32 %v1279, 4294901760
        %1796 = vmatpush1.msra.mxu0 %v1795
        %1797 = vmatprep.subr.mxu0 0.0
        %v1798 = vand.u32 %v1278, 4294901760
        %1799 = vmatpush1.msra.mxu0 %v1798
        %1800 = vmatprep.subr.mxu0 0.0
        %v1801 = vand.u32 %v1277, 4294901760
        %1802 = vmatpush1.msra.mxu0 %v1801
        %1803 = vmatprep.subr.mxu0 0.0
        %v1804 = vand.u32 %v1276, 4294901760
        %1805 = vmatpush1.msra.mxu0 %v1804
        %1806 = vmatprep.subr.mxu0 0.0
        %1807 = vmatpush2.msra.mxu0 0.0
        %1808 = vmatprep.subr.mxu0 0.0
        %1809 = vmatpush2.msra.mxu0 0.0
        %1810 = vmatprep.subr.mxu0 0.0
        %1811 = vmatpush2.msra.mxu0 0.0
        %1812 = vmatprep.subr.mxu0 0.0
        %1813 = vmatpush2.msra.mxu0 0.0
        %1814 = vmatprep.subr.mxu0 0.0
        %1815 = vmatpush2.msra.mxu0 0.0
        %1816 = vmatprep.subr.mxu0 0.0
        %1817 = vmatpush2.msra.mxu0 0.0
        %1818 = vmatprep.subr.mxu0 0.0
        %1819 = vmatpush2.msra.mxu0 0.0
        %1820 = vmatprep.subr.mxu0 0.0
        %1821 = vmatpush2.msra.mxu0 0.0
        %1822 = vmatprep.subr.mxu0 0.0
        %1823 = vmatpush2.msra.mxu0 0.0
        %1824 = vmatprep.subr.mxu0 0.0
        %1825 = vmatpush2.msra.mxu0 0.0
        %1826 = vmatprep.subr.mxu0 0.0
        %1827 = vmatpush2.msra.mxu0 0.0
        %1828 = vmatprep.subr.mxu0 0.0
        %1829 = vmatpush2.msra.mxu0 0.0
        %1830 = vmatprep.subr.mxu0 0.0
        %1831 = vmatpush2.msra.mxu0 0.0
        %1832 = vmatprep.subr.mxu0 0.0
        %1833 = vmatpush2.msra.mxu0 0.0
        %1834 = vmatprep.subr.mxu0 0.0
        %1835 = vmatpush2.msra.mxu0 0.0
        %1836 = vmatprep.subr.mxu0 0.0
        %1837 = vmatpush2.msra.mxu0 0.0
        %1838 = vmatprep.mubr.f32.mxu0 0.0
        %v1839 = vand.u32 %v1306, 4294901760
        %1840 = vmatmul.mubr.f32.gmra.mxu0 %v1839
        %v1841 = vpop.f32.mrf.mxu0
        %v1842 = vadd.f32 %v1763, %v1841
        %v1843 = vpop.f32.mrf.mxu0
        %1844 = vdwg.mxu0
        %s1845 = smul.u32 %s26, 2
        %v1847 = vcombine.high %v1842, %v1842
        %v1849 = vunpack.c.l.s4 1966171168
        %v1850 = vunpack.c.0.s8 %v1849
        %v1851 = vlaneseq
        %v1852 = vshrl.u32 %v1851, 7
        %v1853 = vsub.s32 %v1850, %v1852
        %v1854 = vrot.slane %v1842, %v1853
        %v1856 = vunpack.c.l.s4 1966171168
        %v1857 = vunpack.c.0.s8 %v1856
        %v1858 = vlaneseq
        %v1859 = vshrl.u32 %v1858, 7
        %v1860 = vsub.s32 %v1857, %v1859
        %v1861 = vrot.slane %v1847, %v1860
        %v1862 = vcombine.high %v1854, %v1854
        %v1863 = vcombine.high %v1861, %v1861
        %v1865 = vunpack.c.l.s4 1966171168
        %v1866 = vunpack.c.0.s8 %v1865
        %v1867 = vlaneseq
        %v1868 = vshrl.u32 %v1867, 7
        %v1869 = vsub.s32 %v1866, %v1868
        %v1870 = vrot.slane %v1854, %v1869
        %v1872 = vunpack.c.l.s4 1966171168
        %v1873 = vunpack.c.0.s8 %v1872
        %v1874 = vlaneseq
        %v1875 = vshrl.u32 %v1874, 7
        %v1876 = vsub.s32 %v1873, %v1875
        %v1877 = vrot.slane %v1861, %v1876
        %v1879 = vunpack.c.l.s4 1966171168
        %v1880 = vunpack.c.0.s8 %v1879
        %v1881 = vlaneseq
        %v1882 = vshrl.u32 %v1881, 7
        %v1883 = vsub.s32 %v1880, %v1882
        %v1884 = vrot.slane %v1862, %v1883
        %v1886 = vunpack.c.l.s4 1966171168
        %v1887 = vunpack.c.0.s8 %v1886
        %v1888 = vlaneseq
        %v1889 = vshrl.u32 %v1888, 7
        %v1890 = vsub.s32 %v1887, %v1889
        %v1891 = vrot.slane %v1863, %v1890
        %v1892 = vcombine.high %v1870, %v1870
        %v1893 = vcombine.high %v1884, %v1884
        %s1900 = scalar_lea.vmem [#allocation8], %s1845
        %vm1901 = vcmask 122880
        %1902 = vst.msk [vmem:[%s1900] sm:$0x1] %vm1901, %v1870
        %1903 = vst.msk [vmem:[%s1900 + $0x4] sm:$0x1] %vm1901, %v1884
        %1904 = vst.msk [vmem:[%s1900 + $0x8] sm:$0x1] %vm1901, %v1892
        %1905 = vst.msk [vmem:[%s1900 + $0xc] sm:$0x1] %vm1901, %v1893
        %1906 = vst.msk [vmem:[%s1900 + $0x10] sm:$0x1] %vm1901, %v1877
        %1907 = vst.msk [vmem:[%s1900 + $0x14] sm:$0x1] %vm1901, %v1891
        %v1908 = vld [vmem:[%s231 + $0x4] sm:$0x1]
        %v1909 = vld [vmem:[%s231 + $0xc] sm:$0x1]
        %v1910 = vld [vmem:[%s231 + $0x14] sm:$0x1]
        %v1911 = vld [vmem:[%s231 + $0x1c] sm:$0x1]
        %v1912 = vld [vmem:[%s231 + $0x24] sm:$0x1]
        %v1913 = vld [vmem:[%s231 + $0x2c] sm:$0x1]
        %v1920 = vrot.slane %v1909, 7
        %v1921 = vsel %vm340, %v1920, %v1908
        %v1922 = vrot.slane %v1910, 6
        %v1923 = vsel %vm343, %v1922, %v1921
        %v1924 = vrot.slane %v1911, 5
        %v1925 = vsel %vm346, %v1924, %v1923
        %v1926 = vrot.slane %v1912, 4
        %v1927 = vsel %vm349, %v1926, %v1925
        %v1928 = vrot.slane %v1913, 3
        %v1929 = vsel %vm352, %v1928, %v1927
        %v1930 = vsel %vm410, %v1929, 0
        %1932 = vmatprep.subr.mxu0 0.0
        %1933 = vmatpush1.msra.mxu0 0.0
        %1934 = vmatprep.subr.mxu0 0.0
        %1935 = vmatpush1.msra.mxu0 0.0
        %1936 = vmatprep.subr.mxu0 0.0
        %1937 = vmatpush1.msra.mxu0 0.0
        %1938 = vmatprep.subr.mxu0 0.0
        %1939 = vmatpush1.msra.mxu0 0.0
        %1940 = vmatprep.subr.mxu0 0.0
        %1941 = vmatpush1.msra.mxu0 0.0
        %1942 = vmatprep.subr.mxu0 0.0
        %1943 = vmatpush1.msra.mxu0 0.0
        %1944 = vmatprep.subr.mxu0 0.0
        %1945 = vmatpush1.msra.mxu0 0.0
        %1946 = vmatprep.subr.mxu0 0.0
        %1947 = vmatpush1.msra.mxu0 0.0
        %1948 = vmatprep.subr.mxu0 0.0
        %v1949 = vand.u32 %v1283, 4294901760
        %1950 = vmatpush1.msra.mxu0 %v1949
        %1951 = vmatprep.subr.mxu0 0.0
        %v1952 = vand.u32 %v1282, 4294901760
        %1953 = vmatpush1.msra.mxu0 %v1952
        %1954 = vmatprep.subr.mxu0 0.0
        %v1955 = vand.u32 %v1281, 4294901760
        %1956 = vmatpush1.msra.mxu0 %v1955
        %1957 = vmatprep.subr.mxu0 0.0
        %v1958 = vand.u32 %v1280, 4294901760
        %1959 = vmatpush1.msra.mxu0 %v1958
        %1960 = vmatprep.subr.mxu0 0.0
        %v1961 = vand.u32 %v1279, 4294901760
        %1962 = vmatpush1.msra.mxu0 %v1961
        %1963 = vmatprep.subr.mxu0 0.0
        %v1964 = vand.u32 %v1278, 4294901760
        %1965 = vmatpush1.msra.mxu0 %v1964
        %1966 = vmatprep.subr.mxu0 0.0
        %v1967 = vand.u32 %v1277, 4294901760
        %1968 = vmatpush1.msra.mxu0 %v1967
        %1969 = vmatprep.subr.mxu0 0.0
        %v1970 = vand.u32 %v1276, 4294901760
        %1971 = vmatpush1.msra.mxu0 %v1970
        %1972 = vmatprep.subr.mxu0 0.0
        %1973 = vmatpush2.msra.mxu0 0.0
        %1974 = vmatprep.subr.mxu0 0.0
        %1975 = vmatpush2.msra.mxu0 0.0
        %1976 = vmatprep.subr.mxu0 0.0
        %1977 = vmatpush2.msra.mxu0 0.0
        %1978 = vmatprep.subr.mxu0 0.0
        %1979 = vmatpush2.msra.mxu0 0.0
        %1980 = vmatprep.subr.mxu0 0.0
        %1981 = vmatpush2.msra.mxu0 0.0
        %1982 = vmatprep.subr.mxu0 0.0
        %1983 = vmatpush2.msra.mxu0 0.0
        %1984 = vmatprep.subr.mxu0 0.0
        %1985 = vmatpush2.msra.mxu0 0.0
        %1986 = vmatprep.subr.mxu0 0.0
        %1987 = vmatpush2.msra.mxu0 0.0
        %1988 = vmatprep.subr.mxu0 0.0
        %1989 = vmatpush2.msra.mxu0 0.0
        %1990 = vmatprep.subr.mxu0 0.0
        %1991 = vmatpush2.msra.mxu0 0.0
        %1992 = vmatprep.subr.mxu0 0.0
        %1993 = vmatpush2.msra.mxu0 0.0
        %1994 = vmatprep.subr.mxu0 0.0
        %1995 = vmatpush2.msra.mxu0 0.0
        %1996 = vmatprep.subr.mxu0 0.0
        %1997 = vmatpush2.msra.mxu0 0.0
        %1998 = vmatprep.subr.mxu0 0.0
        %1999 = vmatpush2.msra.mxu0 0.0
        %2000 = vmatprep.subr.mxu0 0.0
        %2001 = vmatpush2.msra.mxu0 0.0
        %2002 = vmatprep.subr.mxu0 0.0
        %2003 = vmatpush2.msra.mxu0 0.0
        %2004 = vmatprep.mubr.f32.mxu0 0.0
        %v2005 = vand.u32 %v1930, 4294901760
        %v2006 = vsub.f32 %v1930, %v2005
        %v2007 = vand.u32 %v2006, 4294901760
        %v2008 = vsub.f32 %v2006, %v2007
        %v2009 = vand.u32 %v2008, 4294901760
        %2010 = vmatmul.mubr.f32.gmra.mxu0 %v2009
        %v2011 = vpop.f32.mrf.mxu0
        %v2012 = vadd.f32 0.0, %v2011
        %v2013 = vpop.f32.mrf.mxu0
        %2014 = vdwg.mxu0
        %2015 = vmatprep.subr.mxu0 0.0
        %2016 = vmatpush1.msra.mxu0 0.0
        %2017 = vmatprep.subr.mxu0 0.0
        %2018 = vmatpush1.msra.mxu0 0.0
        %2019 = vmatprep.subr.mxu0 0.0
        %2020 = vmatpush1.msra.mxu0 0.0
        %2021 = vmatprep.subr.mxu0 0.0
        %2022 = vmatpush1.msra.mxu0 0.0
        %2023 = vmatprep.subr.mxu0 0.0
        %2024 = vmatpush1.msra.mxu0 0.0
        %2025 = vmatprep.subr.mxu0 0.0
        %2026 = vmatpush1.msra.mxu0 0.0
        %2027 = vmatprep.subr.mxu0 0.0
        %2028 = vmatpush1.msra.mxu0 0.0
        %2029 = vmatprep.subr.mxu0 0.0
        %2030 = vmatpush1.msra.mxu0 0.0
        %2031 = vmatprep.subr.mxu0 0.0
        %v2032 = vand.u32 %v1283, 4294901760
        %v2033 = vsub.f32 %v1283, %v2032
        %v2034 = vand.u32 %v2033, 4294901760
        %v2035 = vsub.f32 %v2033, %v2034
        %v2036 = vand.u32 %v2035, 4294901760
        %2037 = vmatpush1.msra.mxu0 %v2036
        %2038 = vmatprep.subr.mxu0 0.0
        %v2039 = vand.u32 %v1282, 4294901760
        %v2040 = vsub.f32 %v1282, %v2039
        %v2041 = vand.u32 %v2040, 4294901760
        %v2042 = vsub.f32 %v2040, %v2041
        %v2043 = vand.u32 %v2042, 4294901760
        %2044 = vmatpush1.msra.mxu0 %v2043
        %2045 = vmatprep.subr.mxu0 0.0
        %v2046 = vand.u32 %v1281, 4294901760
        %v2047 = vsub.f32 %v1281, %v2046
        %v2048 = vand.u32 %v2047, 4294901760
        %v2049 = vsub.f32 %v2047, %v2048
        %v2050 = vand.u32 %v2049, 4294901760
        %2051 = vmatpush1.msra.mxu0 %v2050
        %2052 = vmatprep.subr.mxu0 0.0
        %v2053 = vand.u32 %v1280, 4294901760
        %v2054 = vsub.f32 %v1280, %v2053
        %v2055 = vand.u32 %v2054, 4294901760
        %v2056 = vsub.f32 %v2054, %v2055
        %v2057 = vand.u32 %v2056, 4294901760
        %2058 = vmatpush1.msra.mxu0 %v2057
        %2059 = vmatprep.subr.mxu0 0.0
        %v2060 = vand.u32 %v1279, 4294901760
        %v2061 = vsub.f32 %v1279, %v2060
        %v2062 = vand.u32 %v2061, 4294901760
        %v2063 = vsub.f32 %v2061, %v2062
        %v2064 = vand.u32 %v2063, 4294901760
        %2065 = vmatpush1.msra.mxu0 %v2064
        %2066 = vmatprep.subr.mxu0 0.0
        %v2067 = vand.u32 %v1278, 4294901760
        %v2068 = vsub.f32 %v1278, %v2067
        %v2069 = vand.u32 %v2068, 4294901760
        %v2070 = vsub.f32 %v2068, %v2069
        %v2071 = vand.u32 %v2070, 4294901760
        %2072 = vmatpush1.msra.mxu0 %v2071
        %2073 = vmatprep.subr.mxu0 0.0
        %v2074 = vand.u32 %v1277, 4294901760
        %v2075 = vsub.f32 %v1277, %v2074
        %v2076 = vand.u32 %v2075, 4294901760
        %v2077 = vsub.f32 %v2075, %v2076
        %v2078 = vand.u32 %v2077, 4294901760
        %2079 = vmatpush1.msra.mxu0 %v2078
        %2080 = vmatprep.subr.mxu0 0.0
        %v2081 = vand.u32 %v1276, 4294901760
        %v2082 = vsub.f32 %v1276, %v2081
        %v2083 = vand.u32 %v2082, 4294901760
        %v2084 = vsub.f32 %v2082, %v2083
        %v2085 = vand.u32 %v2084, 4294901760
        %2086 = vmatpush1.msra.mxu0 %v2085
        %2087 = vmatprep.subr.mxu0 0.0
        %2088 = vmatpush2.msra.mxu0 0.0
        %2089 = vmatprep.subr.mxu0 0.0
        %2090 = vmatpush2.msra.mxu0 0.0
        %2091 = vmatprep.subr.mxu0 0.0
        %2092 = vmatpush2.msra.mxu0 0.0
        %2093 = vmatprep.subr.mxu0 0.0
        %2094 = vmatpush2.msra.mxu0 0.0
        %2095 = vmatprep.subr.mxu0 0.0
        %2096 = vmatpush2.msra.mxu0 0.0
        %2097 = vmatprep.subr.mxu0 0.0
        %2098 = vmatpush2.msra.mxu0 0.0
        %2099 = vmatprep.subr.mxu0 0.0
        %2100 = vmatpush2.msra.mxu0 0.0
        %2101 = vmatprep.subr.mxu0 0.0
        %2102 = vmatpush2.msra.mxu0 0.0
        %2103 = vmatprep.subr.mxu0 0.0
        %2104 = vmatpush2.msra.mxu0 0.0
        %2105 = vmatprep.subr.mxu0 0.0
        %2106 = vmatpush2.msra.mxu0 0.0
        %2107 = vmatprep.subr.mxu0 0.0
        %2108 = vmatpush2.msra.mxu0 0.0
        %2109 = vmatprep.subr.mxu0 0.0
        %2110 = vmatpush2.msra.mxu0 0.0
        %2111 = vmatprep.subr.mxu0 0.0
        %2112 = vmatpush2.msra.mxu0 0.0
        %2113 = vmatprep.subr.mxu0 0.0
        %2114 = vmatpush2.msra.mxu0 0.0
        %2115 = vmatprep.subr.mxu0 0.0
        %2116 = vmatpush2.msra.mxu0 0.0
        %2117 = vmatprep.subr.mxu0 0.0
        %2118 = vmatpush2.msra.mxu0 0.0
        %2119 = vmatprep.mubr.f32.mxu0 0.0
        %v2120 = vand.u32 %v1930, 4294901760
        %2121 = vmatmul.mubr.f32.gmra.mxu0 %v2120
        %v2122 = vpop.f32.mrf.mxu0
        %v2123 = vadd.f32 %v2012, %v2122
        %v2124 = vpop.f32.mrf.mxu0
        %2125 = vdwg.mxu0
        %2126 = vmatprep.subr.mxu0 0.0
        %2127 = vmatpush1.msra.mxu0 0.0
        %2128 = vmatprep.subr.mxu0 0.0
        %2129 = vmatpush1.msra.mxu0 0.0
        %2130 = vmatprep.subr.mxu0 0.0
        %2131 = vmatpush1.msra.mxu0 0.0
        %2132 = vmatprep.subr.mxu0 0.0
        %2133 = vmatpush1.msra.mxu0 0.0
        %2134 = vmatprep.subr.mxu0 0.0
        %2135 = vmatpush1.msra.mxu0 0.0
        %2136 = vmatprep.subr.mxu0 0.0
        %2137 = vmatpush1.msra.mxu0 0.0
        %2138 = vmatprep.subr.mxu0 0.0
        %2139 = vmatpush1.msra.mxu0 0.0
        %2140 = vmatprep.subr.mxu0 0.0
        %2141 = vmatpush1.msra.mxu0 0.0
        %2142 = vmatprep.subr.mxu0 0.0
        %v2143 = vand.u32 %v1283, 4294901760
        %v2144 = vsub.f32 %v1283, %v2143
        %2145 = vmatpush1.msra.mxu0 %v2144
        %2146 = vmatprep.subr.mxu0 0.0
        %v2147 = vand.u32 %v1282, 4294901760
        %v2148 = vsub.f32 %v1282, %v2147
        %2149 = vmatpush1.msra.mxu0 %v2148
        %2150 = vmatprep.subr.mxu0 0.0
        %v2151 = vand.u32 %v1281, 4294901760
        %v2152 = vsub.f32 %v1281, %v2151
        %2153 = vmatpush1.msra.mxu0 %v2152
        %2154 = vmatprep.subr.mxu0 0.0
        %v2155 = vand.u32 %v1280, 4294901760
        %v2156 = vsub.f32 %v1280, %v2155
        %2157 = vmatpush1.msra.mxu0 %v2156
        %2158 = vmatprep.subr.mxu0 0.0
        %v2159 = vand.u32 %v1279, 4294901760
        %v2160 = vsub.f32 %v1279, %v2159
        %2161 = vmatpush1.msra.mxu0 %v2160
        %2162 = vmatprep.subr.mxu0 0.0
        %v2163 = vand.u32 %v1278, 4294901760
        %v2164 = vsub.f32 %v1278, %v2163
        %2165 = vmatpush1.msra.mxu0 %v2164
        %2166 = vmatprep.subr.mxu0 0.0
        %v2167 = vand.u32 %v1277, 4294901760
        %v2168 = vsub.f32 %v1277, %v2167
        %2169 = vmatpush1.msra.mxu0 %v2168
        %2170 = vmatprep.subr.mxu0 0.0
        %v2171 = vand.u32 %v1276, 4294901760
        %v2172 = vsub.f32 %v1276, %v2171
        %2173 = vmatpush1.msra.mxu0 %v2172
        %2174 = vmatprep.subr.mxu0 0.0
        %2175 = vmatpush2.msra.mxu0 0.0
        %2176 = vmatprep.subr.mxu0 0.0
        %2177 = vmatpush2.msra.mxu0 0.0
        %2178 = vmatprep.subr.mxu0 0.0
        %2179 = vmatpush2.msra.mxu0 0.0
        %2180 = vmatprep.subr.mxu0 0.0
        %2181 = vmatpush2.msra.mxu0 0.0
        %2182 = vmatprep.subr.mxu0 0.0
        %2183 = vmatpush2.msra.mxu0 0.0
        %2184 = vmatprep.subr.mxu0 0.0
        %2185 = vmatpush2.msra.mxu0 0.0
        %2186 = vmatprep.subr.mxu0 0.0
        %2187 = vmatpush2.msra.mxu0 0.0
        %2188 = vmatprep.subr.mxu0 0.0
        %2189 = vmatpush2.msra.mxu0 0.0
        %2190 = vmatprep.subr.mxu0 0.0
        %2191 = vmatpush2.msra.mxu0 0.0
        %2192 = vmatprep.subr.mxu0 0.0
        %2193 = vmatpush2.msra.mxu0 0.0
        %2194 = vmatprep.subr.mxu0 0.0
        %2195 = vmatpush2.msra.mxu0 0.0
        %2196 = vmatprep.subr.mxu0 0.0
        %2197 = vmatpush2.msra.mxu0 0.0
        %2198 = vmatprep.subr.mxu0 0.0
        %2199 = vmatpush2.msra.mxu0 0.0
        %2200 = vmatprep.subr.mxu0 0.0
        %2201 = vmatpush2.msra.mxu0 0.0
        %2202 = vmatprep.subr.mxu0 0.0
        %2203 = vmatpush2.msra.mxu0 0.0
        %2204 = vmatprep.subr.mxu0 0.0
        %2205 = vmatpush2.msra.mxu0 0.0
        %2206 = vmatprep.mubr.f32.mxu0 0.0
        %v2207 = vand.u32 %v1930, 4294901760
        %v2208 = vsub.f32 %v1930, %v2207
        %2209 = vmatmul.mubr.f32.gmra.mxu0 %v2208
        %v2210 = vpop.f32.mrf.mxu0
        %v2211 = vadd.f32 %v2123, %v2210
        %v2212 = vpop.f32.mrf.mxu0
        %2213 = vdwg.mxu0
        %2214 = vmatprep.subr.mxu0 0.0
        %2215 = vmatpush1.msra.mxu0 0.0
        %2216 = vmatprep.subr.mxu0 0.0
        %2217 = vmatpush1.msra.mxu0 0.0
        %2218 = vmatprep.subr.mxu0 0.0
        %2219 = vmatpush1.msra.mxu0 0.0
        %2220 = vmatprep.subr.mxu0 0.0
        %2221 = vmatpush1.msra.mxu0 0.0
        %2222 = vmatprep.subr.mxu0 0.0
        %2223 = vmatpush1.msra.mxu0 0.0
        %2224 = vmatprep.subr.mxu0 0.0
        %2225 = vmatpush1.msra.mxu0 0.0
        %2226 = vmatprep.subr.mxu0 0.0
        %2227 = vmatpush1.msra.mxu0 0.0
        %2228 = vmatprep.subr.mxu0 0.0
        %2229 = vmatpush1.msra.mxu0 0.0
        %2230 = vmatprep.subr.mxu0 0.0
        %v2231 = vand.u32 %v1283, 4294901760
        %2232 = vmatpush1.msra.mxu0 %v2231
        %2233 = vmatprep.subr.mxu0 0.0
        %v2234 = vand.u32 %v1282, 4294901760
        %2235 = vmatpush1.msra.mxu0 %v2234
        %2236 = vmatprep.subr.mxu0 0.0
        %v2237 = vand.u32 %v1281, 4294901760
        %2238 = vmatpush1.msra.mxu0 %v2237
        %2239 = vmatprep.subr.mxu0 0.0
        %v2240 = vand.u32 %v1280, 4294901760
        %2241 = vmatpush1.msra.mxu0 %v2240
        %2242 = vmatprep.subr.mxu0 0.0
        %v2243 = vand.u32 %v1279, 4294901760
        %2244 = vmatpush1.msra.mxu0 %v2243
        %2245 = vmatprep.subr.mxu0 0.0
        %v2246 = vand.u32 %v1278, 4294901760
        %2247 = vmatpush1.msra.mxu0 %v2246
        %2248 = vmatprep.subr.mxu0 0.0
        %v2249 = vand.u32 %v1277, 4294901760
        %2250 = vmatpush1.msra.mxu0 %v2249
        %2251 = vmatprep.subr.mxu0 0.0
        %v2252 = vand.u32 %v1276, 4294901760
        %2253 = vmatpush1.msra.mxu0 %v2252
        %2254 = vmatprep.subr.mxu0 0.0
        %2255 = vmatpush2.msra.mxu0 0.0
        %2256 = vmatprep.subr.mxu0 0.0
        %2257 = vmatpush2.msra.mxu0 0.0
        %2258 = vmatprep.subr.mxu0 0.0
        %2259 = vmatpush2.msra.mxu0 0.0
        %2260 = vmatprep.subr.mxu0 0.0
        %2261 = vmatpush2.msra.mxu0 0.0
        %2262 = vmatprep.subr.mxu0 0.0
        %2263 = vmatpush2.msra.mxu0 0.0
        %2264 = vmatprep.subr.mxu0 0.0
        %2265 = vmatpush2.msra.mxu0 0.0
        %2266 = vmatprep.subr.mxu0 0.0
        %2267 = vmatpush2.msra.mxu0 0.0
        %2268 = vmatprep.subr.mxu0 0.0
        %2269 = vmatpush2.msra.mxu0 0.0
        %2270 = vmatprep.subr.mxu0 0.0
        %2271 = vmatpush2.msra.mxu0 0.0
        %2272 = vmatprep.subr.mxu0 0.0
        %2273 = vmatpush2.msra.mxu0 0.0
        %2274 = vmatprep.subr.mxu0 0.0
        %2275 = vmatpush2.msra.mxu0 0.0
        %2276 = vmatprep.subr.mxu0 0.0
        %2277 = vmatpush2.msra.mxu0 0.0
        %2278 = vmatprep.subr.mxu0 0.0
        %2279 = vmatpush2.msra.mxu0 0.0
        %2280 = vmatprep.subr.mxu0 0.0
        %2281 = vmatpush2.msra.mxu0 0.0
        %2282 = vmatprep.subr.mxu0 0.0
        %2283 = vmatpush2.msra.mxu0 0.0
        %2284 = vmatprep.subr.mxu0 0.0
        %2285 = vmatpush2.msra.mxu0 0.0
        %2286 = vmatprep.mubr.f32.mxu0 0.0
        %v2287 = vand.u32 %v1930, 4294901760
        %v2288 = vsub.f32 %v1930, %v2287
        %v2289 = vand.u32 %v2288, 4294901760
        %2290 = vmatmul.mubr.f32.gmra.mxu0 %v2289
        %v2291 = vpop.f32.mrf.mxu0
        %v2292 = vadd.f32 %v2211, %v2291
        %v2293 = vpop.f32.mrf.mxu0
        %2294 = vdwg.mxu0
        %2295 = vmatprep.subr.mxu0 0.0
        %2296 = vmatpush1.msra.mxu0 0.0
        %2297 = vmatprep.subr.mxu0 0.0
        %2298 = vmatpush1.msra.mxu0 0.0
        %2299 = vmatprep.subr.mxu0 0.0
        %2300 = vmatpush1.msra.mxu0 0.0
        %2301 = vmatprep.subr.mxu0 0.0
        %2302 = vmatpush1.msra.mxu0 0.0
        %2303 = vmatprep.subr.mxu0 0.0
        %2304 = vmatpush1.msra.mxu0 0.0
        %2305 = vmatprep.subr.mxu0 0.0
        %2306 = vmatpush1.msra.mxu0 0.0
        %2307 = vmatprep.subr.mxu0 0.0
        %2308 = vmatpush1.msra.mxu0 0.0
        %2309 = vmatprep.subr.mxu0 0.0
        %2310 = vmatpush1.msra.mxu0 0.0
        %2311 = vmatprep.subr.mxu0 0.0
        %v2312 = vand.u32 %v1283, 4294901760
        %v2313 = vsub.f32 %v1283, %v2312
        %v2314 = vand.u32 %v2313, 4294901760
        %2315 = vmatpush1.msra.mxu0 %v2314
        %2316 = vmatprep.subr.mxu0 0.0
        %v2317 = vand.u32 %v1282, 4294901760
        %v2318 = vsub.f32 %v1282, %v2317
        %v2319 = vand.u32 %v2318, 4294901760
        %2320 = vmatpush1.msra.mxu0 %v2319
        %2321 = vmatprep.subr.mxu0 0.0
        %v2322 = vand.u32 %v1281, 4294901760
        %v2323 = vsub.f32 %v1281, %v2322
        %v2324 = vand.u32 %v2323, 4294901760
        %2325 = vmatpush1.msra.mxu0 %v2324
        %2326 = vmatprep.subr.mxu0 0.0
        %v2327 = vand.u32 %v1280, 4294901760
        %v2328 = vsub.f32 %v1280, %v2327
        %v2329 = vand.u32 %v2328, 4294901760
        %2330 = vmatpush1.msra.mxu0 %v2329
        %2331 = vmatprep.subr.mxu0 0.0
        %v2332 = vand.u32 %v1279, 4294901760
        %v2333 = vsub.f32 %v1279, %v2332
        %v2334 = vand.u32 %v2333, 4294901760
        %2335 = vmatpush1.msra.mxu0 %v2334
        %2336 = vmatprep.subr.mxu0 0.0
        %v2337 = vand.u32 %v1278, 4294901760
        %v2338 = vsub.f32 %v1278, %v2337
        %v2339 = vand.u32 %v2338, 4294901760
        %2340 = vmatpush1.msra.mxu0 %v2339
        %2341 = vmatprep.subr.mxu0 0.0
        %v2342 = vand.u32 %v1277, 4294901760
        %v2343 = vsub.f32 %v1277, %v2342
        %v2344 = vand.u32 %v2343, 4294901760
        %2345 = vmatpush1.msra.mxu0 %v2344
        %2346 = vmatprep.subr.mxu0 0.0
        %v2347 = vand.u32 %v1276, 4294901760
        %v2348 = vsub.f32 %v1276, %v2347
        %v2349 = vand.u32 %v2348, 4294901760
        %2350 = vmatpush1.msra.mxu0 %v2349
        %2351 = vmatprep.subr.mxu0 0.0
        %2352 = vmatpush2.msra.mxu0 0.0
        %2353 = vmatprep.subr.mxu0 0.0
        %2354 = vmatpush2.msra.mxu0 0.0
        %2355 = vmatprep.subr.mxu0 0.0
        %2356 = vmatpush2.msra.mxu0 0.0
        %2357 = vmatprep.subr.mxu0 0.0
        %2358 = vmatpush2.msra.mxu0 0.0
        %2359 = vmatprep.subr.mxu0 0.0
        %2360 = vmatpush2.msra.mxu0 0.0
        %2361 = vmatprep.subr.mxu0 0.0
        %2362 = vmatpush2.msra.mxu0 0.0
        %2363 = vmatprep.subr.mxu0 0.0
        %2364 = vmatpush2.msra.mxu0 0.0
        %2365 = vmatprep.subr.mxu0 0.0
        %2366 = vmatpush2.msra.mxu0 0.0
        %2367 = vmatprep.subr.mxu0 0.0
        %2368 = vmatpush2.msra.mxu0 0.0
        %2369 = vmatprep.subr.mxu0 0.0
        %2370 = vmatpush2.msra.mxu0 0.0
        %2371 = vmatprep.subr.mxu0 0.0
        %2372 = vmatpush2.msra.mxu0 0.0
        %2373 = vmatprep.subr.mxu0 0.0
        %2374 = vmatpush2.msra.mxu0 0.0
        %2375 = vmatprep.subr.mxu0 0.0
        %2376 = vmatpush2.msra.mxu0 0.0
        %2377 = vmatprep.subr.mxu0 0.0
        %2378 = vmatpush2.msra.mxu0 0.0
        %2379 = vmatprep.subr.mxu0 0.0
        %2380 = vmatpush2.msra.mxu0 0.0
        %2381 = vmatprep.subr.mxu0 0.0
        %2382 = vmatpush2.msra.mxu0 0.0
        %2383 = vmatprep.mubr.f32.mxu0 0.0
        %v2384 = vand.u32 %v1930, 4294901760
        %2385 = vmatmul.mubr.f32.gmra.mxu0 %v2384
        %v2386 = vpop.f32.mrf.mxu0
        %v2387 = vadd.f32 %v2292, %v2386
        %v2388 = vpop.f32.mrf.mxu0
        %2389 = vdwg.mxu0
        %2390 = vmatprep.subr.mxu0 0.0
        %2391 = vmatpush1.msra.mxu0 0.0
        %2392 = vmatprep.subr.mxu0 0.0
        %2393 = vmatpush1.msra.mxu0 0.0
        %2394 = vmatprep.subr.mxu0 0.0
        %2395 = vmatpush1.msra.mxu0 0.0
        %2396 = vmatprep.subr.mxu0 0.0
        %2397 = vmatpush1.msra.mxu0 0.0
        %2398 = vmatprep.subr.mxu0 0.0
        %2399 = vmatpush1.msra.mxu0 0.0
        %2400 = vmatprep.subr.mxu0 0.0
        %2401 = vmatpush1.msra.mxu0 0.0
        %2402 = vmatprep.subr.mxu0 0.0
        %2403 = vmatpush1.msra.mxu0 0.0
        %2404 = vmatprep.subr.mxu0 0.0
        %2405 = vmatpush1.msra.mxu0 0.0
        %2406 = vmatprep.subr.mxu0 0.0
        %v2407 = vand.u32 %v1283, 4294901760
        %2408 = vmatpush1.msra.mxu0 %v2407
        %2409 = vmatprep.subr.mxu0 0.0
        %v2410 = vand.u32 %v1282, 4294901760
        %2411 = vmatpush1.msra.mxu0 %v2410
        %2412 = vmatprep.subr.mxu0 0.0
        %v2413 = vand.u32 %v1281, 4294901760
        %2414 = vmatpush1.msra.mxu0 %v2413
        %2415 = vmatprep.subr.mxu0 0.0
        %v2416 = vand.u32 %v1280, 4294901760
        %2417 = vmatpush1.msra.mxu0 %v2416
        %2418 = vmatprep.subr.mxu0 0.0
        %v2419 = vand.u32 %v1279, 4294901760
        %2420 = vmatpush1.msra.mxu0 %v2419
        %2421 = vmatprep.subr.mxu0 0.0
        %v2422 = vand.u32 %v1278, 4294901760
        %2423 = vmatpush1.msra.mxu0 %v2422
        %2424 = vmatprep.subr.mxu0 0.0
        %v2425 = vand.u32 %v1277, 4294901760
        %2426 = vmatpush1.msra.mxu0 %v2425
        %2427 = vmatprep.subr.mxu0 0.0
        %v2428 = vand.u32 %v1276, 4294901760
        %2429 = vmatpush1.msra.mxu0 %v2428
        %2430 = vmatprep.subr.mxu0 0.0
        %2431 = vmatpush2.msra.mxu0 0.0
        %2432 = vmatprep.subr.mxu0 0.0
        %2433 = vmatpush2.msra.mxu0 0.0
        %2434 = vmatprep.subr.mxu0 0.0
        %2435 = vmatpush2.msra.mxu0 0.0
        %2436 = vmatprep.subr.mxu0 0.0
        %2437 = vmatpush2.msra.mxu0 0.0
        %2438 = vmatprep.subr.mxu0 0.0
        %2439 = vmatpush2.msra.mxu0 0.0
        %2440 = vmatprep.subr.mxu0 0.0
        %2441 = vmatpush2.msra.mxu0 0.0
        %2442 = vmatprep.subr.mxu0 0.0
        %2443 = vmatpush2.msra.mxu0 0.0
        %2444 = vmatprep.subr.mxu0 0.0
        %2445 = vmatpush2.msra.mxu0 0.0
        %2446 = vmatprep.subr.mxu0 0.0
        %2447 = vmatpush2.msra.mxu0 0.0
        %2448 = vmatprep.subr.mxu0 0.0
        %2449 = vmatpush2.msra.mxu0 0.0
        %2450 = vmatprep.subr.mxu0 0.0
        %2451 = vmatpush2.msra.mxu0 0.0
        %2452 = vmatprep.subr.mxu0 0.0
        %2453 = vmatpush2.msra.mxu0 0.0
        %2454 = vmatprep.subr.mxu0 0.0
        %2455 = vmatpush2.msra.mxu0 0.0
        %2456 = vmatprep.subr.mxu0 0.0
        %2457 = vmatpush2.msra.mxu0 0.0
        %2458 = vmatprep.subr.mxu0 0.0
        %2459 = vmatpush2.msra.mxu0 0.0
        %2460 = vmatprep.subr.mxu0 0.0
        %2461 = vmatpush2.msra.mxu0 0.0
        %2462 = vmatprep.mubr.f32.mxu0 0.0
        %v2463 = vand.u32 %v1930, 4294901760
        %2464 = vmatmul.mubr.f32.gmra.mxu0 %v2463
        %v2465 = vpop.f32.mrf.mxu0
        %v2466 = vadd.f32 %v2387, %v2465
        %v2467 = vpop.f32.mrf.mxu0
        %2468 = vdwg.mxu0
        %s2469 = sadd.s32 %s1845, 1
        %v2471 = vcombine.high %v2466, %v2466
        %v2473 = vunpack.c.l.s4 1966171168
        %v2474 = vunpack.c.0.s8 %v2473
        %v2475 = vlaneseq
        %v2476 = vshrl.u32 %v2475, 7
        %v2477 = vsub.s32 %v2474, %v2476
        %v2478 = vrot.slane %v2466, %v2477
        %v2480 = vunpack.c.l.s4 1966171168
        %v2481 = vunpack.c.0.s8 %v2480
        %v2482 = vlaneseq
        %v2483 = vshrl.u32 %v2482, 7
        %v2484 = vsub.s32 %v2481, %v2483
        %v2485 = vrot.slane %v2471, %v2484
        %v2486 = vcombine.high %v2478, %v2478
        %v2487 = vcombine.high %v2485, %v2485
        %v2489 = vunpack.c.l.s4 1966171168
        %v2490 = vunpack.c.0.s8 %v2489
        %v2491 = vlaneseq
        %v2492 = vshrl.u32 %v2491, 7
        %v2493 = vsub.s32 %v2490, %v2492
        %v2494 = vrot.slane %v2478, %v2493
        %v2496 = vunpack.c.l.s4 1966171168
        %v2497 = vunpack.c.0.s8 %v2496
        %v2498 = vlaneseq
        %v2499 = vshrl.u32 %v2498, 7
        %v2500 = vsub.s32 %v2497, %v2499
        %v2501 = vrot.slane %v2485, %v2500
        %v2503 = vunpack.c.l.s4 1966171168
        %v2504 = vunpack.c.0.s8 %v2503
        %v2505 = vlaneseq
        %v2506 = vshrl.u32 %v2505, 7
        %v2507 = vsub.s32 %v2504, %v2506
        %v2508 = vrot.slane %v2486, %v2507
        %v2510 = vunpack.c.l.s4 1966171168
        %v2511 = vunpack.c.0.s8 %v2510
        %v2512 = vlaneseq
        %v2513 = vshrl.u32 %v2512, 7
        %v2514 = vsub.s32 %v2511, %v2513
        %v2515 = vrot.slane %v2487, %v2514
        %v2516 = vcombine.high %v2494, %v2494
        %v2517 = vcombine.high %v2508, %v2508
        %s2524 = scalar_lea.vmem [#allocation8], %s2469
        %2525 = vst.msk [vmem:[%s2524] sm:$0x1] %vm1901, %v2494
        %2526 = vst.msk [vmem:[%s2524 + $0x4] sm:$0x1] %vm1901, %v2508
        %2527 = vst.msk [vmem:[%s2524 + $0x8] sm:$0x1] %vm1901, %v2516
        %2528 = vst.msk [vmem:[%s2524 + $0xc] sm:$0x1] %vm1901, %v2517
        %2529 = vst.msk [vmem:[%s2524 + $0x10] sm:$0x1] %vm1901, %v2501
        %2530 = vst.msk [vmem:[%s2524 + $0x14] sm:$0x1] %vm1901, %v2515
        %p2531 = scmp.lt.s32.totalorder %s25, 0
        %s2532 = scalar_select %p2531, %s25, 0
        %p2533 = scmp.lt.s32.totalorder %s26, 1
        %s2534 = scalar_select %p2533, %s26, 1
        %s2535 = smul.addr %s2532, 2
        %s2536 = sadd.s32 %s2534, %s2535
        %s2537 = smul.addr %s2536, 8
        %s2538 = scalar_lea.vmem %s3, %s2537
        // Predicated region
        $region45: #{_nearest_resize_fused.1} parent=31 // pred_check
          %p2539 = pneg %p123
        $region46: #{_nearest_resize_fused.1} parent=31 // pred_check_branch
          %2541 = sbr.rel (%p2539) target = $region48
        $region47: #{_nearest_resize_fused.1} parent=31 // pred_region
          _
        $region48: #{_nearest_resize_fused.1} parent=31 // pred_fallthru
          _
        // Predicated region
        $region49: #{_nearest_resize_fused.1} parent=31 // pred_check
          %p2542 = pneg %p149
        $region50: #{_nearest_resize_fused.1} parent=31 // pred_check_branch
          %2544 = sbr.rel (%p2542) target = $region52
        $region51: #{_nearest_resize_fused.1} parent=31 // pred_region
          %s2545 = smul.u32 6, %s25
          %s2547 = ssub.s32 384, 384
          %2548 = vsyncadd [#allocation4], %s2547
          %s2549 = smul.addr %s2545, 64
          %s2550 = scalar_lea.hbm %s4, %s2549
          %s2551 = sshll.u32 [#allocation8], 4
          %s2552 = int_to_ptr.vmem [resolvable:$true] %s2551
          %2557 = dma.vmem_to_hbm [thread:$0]  %s2552, 384, %s2550, [#allocation4], 64, 64, 4
        $region52: #{_nearest_resize_fused.1} parent=31 // pred_fallthru
          _
        // Predicated region
        $region53: #{_nearest_resize_fused.1} parent=31 // pred_check
          %p2558 = pneg %p149
        $region54: #{_nearest_resize_fused.1} parent=31 // pred_check_branch
          %2560 = sbr.rel (%p2558) target = $region56
        $region55: #{_nearest_resize_fused.1} parent=31 // pred_region
          %2561 = dma.done [#allocation4], 384
        $region56: #{_nearest_resize_fused.1} parent=31 // pred_fallthru
          _
      $region32: #{_nearest_resize_fused.1} parent=5 // pred_fallthru
        _
      %p2562 = scmp.le.s32.totalorder 2, %s16
      // Predicated region
      $region57: #{_nearest_resize_fused.1} parent=5 // pred_check
        %p2563 = pneg %p2562
      $region58: #{_nearest_resize_fused.1} parent=5 // pred_check_branch
        %2565 = sbr.rel (%p2563) target = $region60
      $region59: #{_nearest_resize_fused.1} parent=5 // pred_region
        %s2566 = ssub.s32 %s16, 2
        // Predicated region
        $region61: #{_nearest_resize_fused.1} parent=59 // pred_check
          %p2567 = pneg %p129
        $region62: #{_nearest_resize_fused.1} parent=59 // pred_check_branch
          %2569 = sbr.rel (%p2567) target = $region64
        $region63: #{_nearest_resize_fused.1} parent=59 // pred_region
          %p2570 = scmp.lt.s32.totalorder %s27, 0
          %s2571 = scalar_select %p2570, %s27, 0
          %p2572 = scmp.lt.s32.totalorder %s28, 1
          %s2573 = scalar_select %p2572, %s28, 1
          %s2574 = smul.addr %s2571, 2
          %s2575 = sadd.s32 %s2573, %s2574
          %s2576 = smul.addr %s2575, 8
          %s2577 = scalar_lea.vmem %s3, %s2576
        $region64: #{_nearest_resize_fused.1} parent=59 // pred_fallthru
          _
      $region60: #{_nearest_resize_fused.1} parent=5 // pred_fallthru
        _
    $region6: #{_nearest_resize_fused.1} parent=1 // loop_footer
      %s20 = sadd.s32 1, %s16
    $region7: #{_nearest_resize_fused.1} parent=1 // loop_footer_branch
      %15 = sbr.rel target = $region3
    $region8: #{_nearest_resize_fused.1} parent=1 // loop_exit
      _
    %2578 = vsyncpa [#allocation3], 1
    %s2579 = scalar_lea.sflag [#allocation3], 1
    %2580 = vsyncpa %s2579, 1
    %2581 = vsyncpa [#allocation6], 1
    %2582 = vsyncpa [#allocation4], 1
    %s2583 = scalar_lea.sflag [#allocation4], 1
    %2584 = vsyncpa %s2583, 1

</llo_original>
